<compile_context>
chip_gen: v6e
topology: v6e:2x2x1
jax: 0.10.0
libtpu: 0.0.40
codegen_flags: <defaults>
</compile_context>

<pallas_src>
import functools

import jax
import jax.numpy as jnp
from jax import lax
from jax.experimental import pallas as pl
from jax.experimental.pallas import tpu as pltpu

NEG_SLOPE = 0.01   # nn.LeakyReLU default
BN_EPS = 1e-5      # nn.BatchNorm1d default


# --------------------------------------------------------------------------
# Kernel
# --------------------------------------------------------------------------
def _spatial_mean(ref, axis, inv_hw):
    """AdaptiveAvgPool2d(1) over the flattened spatial axis, f32 accumulation."""
    x = ref[...]
    if x.dtype == jnp.float32:
        return jnp.sum(x, axis=axis) * inv_hw        # no temp, no cast
    # Sub-f32 storage: first reduction level in the storage dtype (bf16 VALU on
    # v6e/v7x) halves both the f32 temporary and the convert+add VALU work.
    hw = x.shape[axis]
    half = hw // 2
    lo = lax.slice_in_dim(x, 0, half, axis=axis)
    hi = lax.slice_in_dim(x, half, 2 * half, axis=axis)
    acc = jnp.sum((lo + hi).astype(jnp.float32), axis=axis)
    if hw % 2:
        tail = lax.slice_in_dim(x, hw - 1, hw, axis=axis)
        acc = acc + jnp.squeeze(tail, axis=axis).astype(jnp.float32)
    return acc * inv_hw


def dognet_kernel(fa_ref, fb_ref,
                  w1a_ref, w1b_ref, w1c_ref, b1_ref,
                  w2_ref, b2_ref,
                  w3_ref, b3_ref,
                  out_ref, *, pool_axis, inv_hw):
    # AdaptiveAvgPool2d(1).view(B, -1): spatial mean, f32 accumulation.
    pa = _spatial_mean(fa_ref, pool_axis, inv_hw)     # [Bt, C] f32, lane-dense
    pb = _spatial_mean(fb_ref, pool_axis, inv_hw)
    diff = jnp.abs(pa - pb)                           # f32 VPU math

    pa_b = pa.astype(jnp.bfloat16)
    pb_b = pb.astype(jnp.bfloat16)
    df_b = diff.astype(jnp.bfloat16)

    # Layer 1: concat([pa, pb, |pa-pb|]) @ W1 expressed as three K=C matmuls
    # (no lane-axis concatenate / relayout).  BN1 is folded into W1/b1.
    h1 = (jnp.dot(pa_b, w1a_ref[...], preferred_element_type=jnp.float32)
          + jnp.dot(pb_b, w1b_ref[...], preferred_element_type=jnp.float32)
          + jnp.dot(df_b, w1c_ref[...], preferred_element_type=jnp.float32)
          + b1_ref[...])
    h1 = jnp.where(h1 >= 0, h1, NEG_SLOPE * h1)       # LeakyReLU(0.01)
    # Dropout(p=0.25): identity in eval mode.

    # Layer 2 (BN2 folded into W2/b2).
    h2 = jnp.dot(h1.astype(jnp.bfloat16), w2_ref[...],
                 preferred_element_type=jnp.float32) + b2_ref[...]
    h2 = jnp.where(h2 >= 0, h2, NEG_SLOPE * h2)

    # Final Linear -> 2 logits (N=2 epilogue; negligible).
    logits = jnp.dot(h2.astype(jnp.bfloat16), w3_ref[...],
                     preferred_element_type=jnp.float32) + b3_ref[...]
    out_ref[...] = logits.astype(out_ref.dtype)


# --------------------------------------------------------------------------
# Param prep (done once, outside the kernel)
# --------------------------------------------------------------------------
def fold_head_params(params, in_features):
    """Fold inference BatchNorm into the preceding Linear; split W1; cast to bf16."""
    (w1, b1, g1, be1, m1, v1,
     w2, b2, g2, be2, m2, v2,
     w3, b3) = params

    def fold(w, b, g, be, m, v):
        s = g * lax.rsqrt(v + BN_EPS)          # [1, out]
        return w * s, (b - m) * s + be

    w1f, b1f = fold(w1, b1, g1, be1, m1, v1)
    w2f, b2f = fold(w2, b2, g2, be2, m2, v2)

    C = in_features
    w1a, w1b, w1c = w1f[:C], w1f[C:2 * C], w1f[2 * C:3 * C]

    bf = lambda x: x.astype(jnp.bfloat16)
    f32 = lambda x: x.astype(jnp.float32)
    return (bf(w1a), bf(w1b), bf(w1c), f32(b1f),
            bf(w2f), f32(b2f),
            bf(w3), f32(b3))


# --------------------------------------------------------------------------
# VMEM budgeting / tiling helpers
# --------------------------------------------------------------------------
def _vmem_capacity_bytes():
    try:
        return int(pltpu.get_tpu_info().vmem_capacity_bytes)
    except Exception:           # unrecognized part / interpret mode
        return 64 << 20         # conservative: v7x per-TensorCore VMEM


def _padded_tile_bytes(shape, itemsize):
    """VMEM footprint of one buffer: last dim padded to 128 lanes, second-to-last
    to 8 sublanes (conservative for sub-32-bit packing)."""
    shape = tuple(shape)
    if len(shape) == 1:
        shape = (1,) + shape
    *lead, s, l = shape
    size = itemsize * (-(-s // 8) * 8) * (-(-l // 128) * 128)
    for d in lead:
        size *= int(d)
    return size


def _pick_batch_tile(B, row_bytes, fixed_bytes, vmem_cap):
    """Largest 8-aligned batch tile whose per-step VMEM stays inside the budget."""
    if B <= 8:
        return B
    budget = int(vmem_cap * 0.75) - fixed_bytes
    bt = budget // max(row_bytes, 1)
    bt = max(8, min(bt, 512, B))
    if vmem_cap <= (64 << 20) and B >= 16:
        # 64 MiB-class parts (v7x) have two TensorCores: keep >=2 grid steps so
        # the "parallel" batch axis can actually be split across them.
        bt = min(bt, pl.cdiv(B, 2))
    bt = (bt // 8) * 8
    return max(8, min(bt, B))


# --------------------------------------------------------------------------
# Wrapper
# --------------------------------------------------------------------------
def dognet_forward(feat_a, feat_b, params, *, channels_last=False):
    """feat_a / feat_b: backbone feature maps in their native layout and dtype.
    NCHW (PyTorch default) or NHWC (channels_last=True, e.g. a TPU-friendly
    backbone).  The only wrapper-side op is a free reshape merging H*W."""
    if channels_last:
        B, H, W, C = feat_a.shape
        HW = H * W
        fa = feat_a.reshape(B, HW, C)
        fb = feat_b.reshape(B, HW, C)
        feat_block = lambda bt: (bt, HW, C)
        pool_axis = 1                       # sublane reduction, C lane-dense
    else:
        B, C, H, W = feat_a.shape
        HW = H * W
        fa = feat_a.reshape(B, C, HW)       # free view, no transpose / cast
        fb = feat_b.reshape(B, C, HW)
        feat_block = lambda bt: (bt, C, HW)
        pool_axis = 2                       # lane (XLU) reduction

    head = fold_head_params(params, C)
    feat_itemsize = fa.dtype.itemsize
    vmem_cap = _vmem_capacity_bytes()

    # --- VMEM accounting (padded tile footprints) ---------------------------
    # Per batch row: 2 inputs x 2 pipeline buffers of the feature tile, plus
    # pooled / hidden activations (and the halved f32 pooling temp when the
    # features are stored sub-f32).
    feat_row_bytes = 2 * 2 * _padded_tile_bytes(feat_block(1)[1:], feat_itemsize)
    act_row_bytes = (3 * C + 512 + 256 + 2) * 4 + (3 * C + 512 + 256) * 2
    if feat_itemsize < 4:
        act_row_bytes += 2 * C * ((HW + 1) // 2) * 4
    row_bytes = feat_row_bytes + act_row_bytes
    # Resident params are double-buffered by the default pipeline.
    param_bytes = sum(_padded_tile_bytes(p.shape, p.dtype.itemsize) for p in head)
    fixed_bytes = 2 * param_bytes + (2 << 20)

    Bt = _pick_batch_tile(B, row_bytes, fixed_bytes, vmem_cap)
    grid = (pl.cdiv(B, Bt),)
    # NOTE: ragged last tile (B % Bt != 0) reads past the batch edge; those
    # garbage rows only feed their own discarded output rows.

    need = Bt * row_bytes + fixed_bytes
    vmem_limit = int(min(int(vmem_cap * 0.85), max(32 << 20, need + (8 << 20))))

    feat_spec = pl.BlockSpec(feat_block(Bt), lambda i: (i, 0, 0))
    resident = lambda shape: pl.BlockSpec(shape, lambda i: (0, 0))  # VMEM-resident
    in_specs = [feat_spec, feat_spec] + [resident(p.shape) for p in head]
    out_spec = pl.BlockSpec((Bt, 2), lambda i: (i, 0))

    head_raw_bytes = sum(int(p.size) * p.dtype.itemsize for p in head)
    flops = 2 * B * (HW * C + 3 * C * 512 + 512 * 256 + 256 * 2)
    bytes_accessed = 2 * B * HW * C * feat_itemsize + head_raw_bytes + B * 2 * 4

    kernel = functools.partial(dognet_kernel, pool_axis=pool_axis, inv_hw=1.0 / HW)
    return pl.pallas_call(
        kernel,
        out_shape=jax.ShapeDtypeStruct((B, 2), jnp.float32),
        grid=grid,
        in_specs=in_specs,
        out_specs=out_spec,
        compiler_params=pltpu.CompilerParams(
            dimension_semantics=("parallel",),
            vmem_limit_bytes=vmem_limit),
        cost_estimate=pl.CostEstimate(flops=int(flops), transcendentals=0,
                                      bytes_accessed=int(bytes_accessed)),
    )(fa, fb, *head)


# --------------------------------------------------------------------------
# Deterministic params + pure-JAX reference (for a sanity check)
# --------------------------------------------------------------------------
def init_params(key, in_features, d1=512, d2=256, d_out=2):
    """PyTorch-style init shapes; weights stored [in, out]."""
    def linear(k, fan_in, fan_out):
        kw, kb = jax.random.split(k)
        bound = 1.0 / jnp.sqrt(jnp.float32(fan_in))
        w = jax.random.uniform(kw, (fan_in, fan_out), jnp.float32, -bound, bound)
        b = jax.random.uniform(kb, (1, fan_out), jnp.float32, -bound, bound)
        return w, b

    def batchnorm(n):
        # PyTorch defaults: gamma=1, beta=0, running_mean=0, running_var=1
        return (jnp.ones((1, n), jnp.float32), jnp.zeros((1, n), jnp.float32),
                jnp.zeros((1, n), jnp.float32), jnp.ones((1, n), jnp.float32))

    k1, k2, k3 = jax.random.split(key, 3)
    w1, b1 = linear(k1, 3 * in_features, d1)
    g1, be1, m1, v1 = batchnorm(d1)
    w2, b2 = linear(k2, d1, d2)
    g2, be2, m2, v2 = batchnorm(d2)
    w3, b3 = linear(k3, d2, d_out)
    return (w1, b1, g1, be1, m1, v1,
            w2, b2, g2, be2, m2, v2,
            w3, b3)


def reference_forward(feat_a, feat_b, params):
    (w1, b1, g1, be1, m1, v1,
     w2, b2, g2, be2, m2, v2,
     w3, b3) = params
    pa = jnp.mean(feat_a, axis=(2, 3))
    pb = jnp.mean(feat_b, axis=(2, 3))
    frt = jnp.concatenate([pa, pb, jnp.abs(pa - pb)], axis=1)

    def lin_bn_lrelu(x, w, b, g, be, m, v):
        h = x @ w + b
        h = (h - m) * lax.rsqrt(v + BN_EPS) * g + be
        return jnp.where(h >= 0, h, NEG_SLOPE * h)

    h1 = lin_bn_lrelu(frt, w1, b1, g1, be1, m1, v1)
    h2 = lin_bn_lrelu(h1, w2, b2, g2, be2, m2, v2)
    return h2 @ w3 + b3


if __name__ == "__main__":
    # Small synthetic shapes: batch=2, backbone feature channels=32, spatial=8x8
    # (stands in for e.g. convnext_small's 768-channel final feature map).
    B, C, H, W = 2, 32, 8, 8
    key = jax.random.PRNGKey(0)
    ka, kb, kp = jax.random.split(key, 3)

    feat_a = jax.random.normal(ka, (B, C, H, W), jnp.float32)   # backbone(image_A)[0]
    feat_b = jax.random.normal(kb, (B, C, H, W), jnp.float32)   # backbone(image_B)[0]
    params = init_params(kp, in_features=C)

    out = dognet_forward(feat_a, feat_b, params)
    jax.block_until_ready(out)
    assert out.shape == (B, 2) and out.dtype == jnp.float32

    # Features / pooling are f32; only the head weights run bf16 on the MXU
    # (with f32 accumulation), so the tolerance vs. the f32 reference is tight.
    ref = reference_forward(feat_a, feat_b, params)
    max_err = float(jnp.max(jnp.abs(out - ref)))
    assert max_err < 5e-2, f"kernel vs reference max abs diff too large: {max_err}"

    print("KERNEL_OK")
</pallas_src>

<mosaic_0001>
module attributes {stable_mosaic.version = 11 : i64} {
  func.func @dognet_kernel(%arg0: i32, %arg1: memref<2x32x64xf32, #tpu.memory_space<vmem>>, %arg2: memref<2x32x64xf32, #tpu.memory_space<vmem>>, %arg3: memref<32x512xbf16, #tpu.memory_space<vmem>>, %arg4: memref<32x512xbf16, #tpu.memory_space<vmem>>, %arg5: memref<32x512xbf16, #tpu.memory_space<vmem>>, %arg6: memref<1x512xf32, #tpu.memory_space<vmem>>, %arg7: memref<512x256xbf16, #tpu.memory_space<vmem>>, %arg8: memref<1x256xf32, #tpu.memory_space<vmem>>, %arg9: memref<256x2xbf16, #tpu.memory_space<vmem>>, %arg10: memref<1x2xf32, #tpu.memory_space<vmem>>, %arg11: memref<2x2xf32, #tpu.memory_space<vmem>>) attributes {dimension_semantics = [#tpu.dimension_semantics<parallel>], iteration_bounds = array<i64: 1>, scalar_prefetch = 0 : i64, scratch_operands = 0 : i64, tpu.core_type = #tpu.core_type<tc>, window_params = [{transform_indices = @transform_0, window_bounds = array<i64: 2, 32, 64>}, {transform_indices = @transform_1, window_bounds = array<i64: 2, 32, 64>}, {pipeline_mode = #tpu.pipeline_mode<synchronous>, transform_indices = @transform_2, window_bounds = array<i64: 32, 512>}, {pipeline_mode = #tpu.pipeline_mode<synchronous>, transform_indices = @transform_3, window_bounds = array<i64: 32, 512>}, {pipeline_mode = #tpu.pipeline_mode<synchronous>, transform_indices = @transform_4, window_bounds = array<i64: 32, 512>}, {pipeline_mode = #tpu.pipeline_mode<synchronous>, transform_indices = @transform_5, window_bounds = array<i64: 1, 512>}, {pipeline_mode = #tpu.pipeline_mode<synchronous>, transform_indices = @transform_6, window_bounds = array<i64: 512, 256>}, {pipeline_mode = #tpu.pipeline_mode<synchronous>, transform_indices = @transform_7, window_bounds = array<i64: 1, 256>}, {pipeline_mode = #tpu.pipeline_mode<synchronous>, transform_indices = @transform_8, window_bounds = array<i64: 256, 2>}, {pipeline_mode = #tpu.pipeline_mode<synchronous>, transform_indices = @transform_9, window_bounds = array<i64: 1, 2>}, {transform_indices = @transform_10, window_bounds = array<i64: 2, 2>}]} {
    %c0 = arith.constant 0 : index
    %c0_0 = arith.constant 0 : index
    %c0_1 = arith.constant 0 : index
    %0 = vector.load %arg1[%c0, %c0_0, %c0_1] : memref<2x32x64xf32, #tpu.memory_space<vmem>>, vector<2x32x64xf32>
    %cst = arith.constant dense<0.000000e+00> : vector<2x32xf32>
    %1 = vector.multi_reduction <add>, %0, %cst [2] : vector<2x32x64xf32> to vector<2x32xf32>
    %cst_2 = arith.constant 1.562500e-02 : f32
    %2 = vector.broadcast %cst_2 : f32 to vector<2x32xf32>
    %3 = arith.mulf %1, %2 : vector<2x32xf32>
    %c0_3 = arith.constant 0 : index
    %c0_4 = arith.constant 0 : index
    %c0_5 = arith.constant 0 : index
    %4 = vector.load %arg2[%c0_3, %c0_4, %c0_5] : memref<2x32x64xf32, #tpu.memory_space<vmem>>, vector<2x32x64xf32>
    %cst_6 = arith.constant dense<0.000000e+00> : vector<2x32xf32>
    %5 = vector.multi_reduction <add>, %4, %cst_6 [2] : vector<2x32x64xf32> to vector<2x32xf32>
    %cst_7 = arith.constant 1.562500e-02 : f32
    %6 = vector.broadcast %cst_7 : f32 to vector<2x32xf32>
    %7 = arith.mulf %5, %6 : vector<2x32xf32>
    %8 = arith.subf %3, %7 : vector<2x32xf32>
    %9 = math.absf %8 : vector<2x32xf32>
    %10 = arith.truncf %3 : vector<2x32xf32> to vector<2x32xbf16>
    %11 = arith.truncf %7 : vector<2x32xf32> to vector<2x32xbf16>
    %12 = arith.truncf %9 : vector<2x32xf32> to vector<2x32xbf16>
    %c0_8 = arith.constant 0 : index
    %c0_9 = arith.constant 0 : index
    %13 = vector.load %arg3[%c0_8, %c0_9] : memref<32x512xbf16, #tpu.memory_space<vmem>>, vector<32x512xbf16>
    %cst_10 = arith.constant dense<0.000000e+00> : vector<2x512xf32>
    %14 = tpu.matmul %10, %13, %cst_10 {dimension_numbers = #tpu.dot_dimension_numbers<[1], [0], [0], [1], [0, 0, 1, 1], [], []>} : vector<2x32xbf16>, vector<32x512xbf16>, vector<2x512xf32> -> vector<2x512xf32>
    %c0_11 = arith.constant 0 : index
    %c0_12 = arith.constant 0 : index
    %15 = vector.load %arg4[%c0_11, %c0_12] : memref<32x512xbf16, #tpu.memory_space<vmem>>, vector<32x512xbf16>
    %cst_13 = arith.constant dense<0.000000e+00> : vector<2x512xf32>
    %16 = tpu.matmul %11, %15, %cst_13 {dimension_numbers = #tpu.dot_dimension_numbers<[1], [0], [0], [1], [0, 0, 1, 1], [], []>} : vector<2x32xbf16>, vector<32x512xbf16>, vector<2x512xf32> -> vector<2x512xf32>
    %17 = arith.addf %14, %16 : vector<2x512xf32>
    %c0_14 = arith.constant 0 : index
    %c0_15 = arith.constant 0 : index
    %18 = vector.load %arg5[%c0_14, %c0_15] : memref<32x512xbf16, #tpu.memory_space<vmem>>, vector<32x512xbf16>
    %cst_16 = arith.constant dense<0.000000e+00> : vector<2x512xf32>
    %19 = tpu.matmul %12, %18, %cst_16 {dimension_numbers = #tpu.dot_dimension_numbers<[1], [0], [0], [1], [0, 0, 1, 1], [], []>} : vector<2x32xbf16>, vector<32x512xbf16>, vector<2x512xf32> -> vector<2x512xf32>
    %20 = arith.addf %17, %19 : vector<2x512xf32>
    %c0_17 = arith.constant 0 : index
    %c0_18 = arith.constant 0 : index
    %21 = vector.load %arg6[%c0_17, %c0_18] : memref<1x512xf32, #tpu.memory_space<vmem>>, vector<1x512xf32>
    %22 = vector.broadcast %21 : vector<1x512xf32> to vector<2x512xf32>
    %23 = arith.addf %20, %22 : vector<2x512xf32>
    %cst_19 = arith.constant 0.000000e+00 : f32
    %24 = vector.broadcast %cst_19 : f32 to vector<2x512xf32>
    %25 = arith.cmpf oge, %23, %24 : vector<2x512xf32>
    %cst_20 = arith.constant 0.00999999977 : f32
    %26 = vector.broadcast %cst_20 : f32 to vector<2x512xf32>
    %27 = arith.mulf %26, %23 : vector<2x512xf32>
    %28 = arith.select %25, %23, %27 : vector<2x512xi1>, vector<2x512xf32>
    %29 = arith.truncf %28 : vector<2x512xf32> to vector<2x512xbf16>
    %c0_21 = arith.constant 0 : index
    %c0_22 = arith.constant 0 : index
    %30 = vector.load %arg7[%c0_21, %c0_22] : memref<512x256xbf16, #tpu.memory_space<vmem>>, vector<512x256xbf16>
    %cst_23 = arith.constant dense<0.000000e+00> : vector<2x256xf32>
    %31 = tpu.matmul %29, %30, %cst_23 {dimension_numbers = #tpu.dot_dimension_numbers<[1], [0], [0], [1], [0, 0, 1, 1], [], []>} : vector<2x512xbf16>, vector<512x256xbf16>, vector<2x256xf32> -> vector<2x256xf32>
    %c0_24 = arith.constant 0 : index
    %c0_25 = arith.constant 0 : index
    %32 = vector.load %arg8[%c0_24, %c0_25] : memref<1x256xf32, #tpu.memory_space<vmem>>, vector<1x256xf32>
    %33 = vector.broadcast %32 : vector<1x256xf32> to vector<2x256xf32>
    %34 = arith.addf %31, %33 : vector<2x256xf32>
    %cst_26 = arith.constant 0.000000e+00 : f32
    %35 = vector.broadcast %cst_26 : f32 to vector<2x256xf32>
    %36 = arith.cmpf oge, %34, %35 : vector<2x256xf32>
    %cst_27 = arith.constant 0.00999999977 : f32
    %37 = vector.broadcast %cst_27 : f32 to vector<2x256xf32>
    %38 = arith.mulf %37, %34 : vector<2x256xf32>
    %39 = arith.select %36, %34, %38 : vector<2x256xi1>, vector<2x256xf32>
    %40 = arith.truncf %39 : vector<2x256xf32> to vector<2x256xbf16>
    %c0_28 = arith.constant 0 : index
    %c0_29 = arith.constant 0 : index
    %41 = vector.load %arg9[%c0_28, %c0_29] : memref<256x2xbf16, #tpu.memory_space<vmem>>, vector<256x2xbf16>
    %cst_30 = arith.constant dense<0.000000e+00> : vector<2x2xf32>
    %42 = tpu.matmul %40, %41, %cst_30 {dimension_numbers = #tpu.dot_dimension_numbers<[1], [0], [0], [1], [0, 0, 1, 1], [], []>} : vector<2x256xbf16>, vector<256x2xbf16>, vector<2x2xf32> -> vector<2x2xf32>
    %c0_31 = arith.constant 0 : index
    %c0_32 = arith.constant 0 : index
    %43 = vector.load %arg10[%c0_31, %c0_32] : memref<1x2xf32, #tpu.memory_space<vmem>>, vector<1x2xf32>
    %44 = vector.broadcast %43 : vector<1x2xf32> to vector<2x2xf32>
    %45 = arith.addf %42, %44 : vector<2x2xf32>
    %c0_33 = arith.constant 0 : index
    %c0_34 = arith.constant 0 : index
    %46 = vector.load %arg11[%c0_33, %c0_34] : memref<2x2xf32, #tpu.memory_space<vmem>>, vector<2x2xf32>
    tpu.vector_store %arg11[%c0_33, %c0_34], %45 {strides = array<i32>} : memref<2x2xf32, #tpu.memory_space<vmem>>, vector<2x2xf32>,
    return
  }
  func.func @transform_0(%arg0: i32) -> (i32, i32, i32) {
    %c0_i32 = arith.constant 0 : i32
    %c0_i32_0 = arith.constant 0 : i32
    %c0_i32_1 = arith.constant 0 : i32
    return %arg0, %c0_i32, %c0_i32_0 : i32, i32, i32
  }
  func.func @transform_1(%arg0: i32) -> (i32, i32, i32) {
    %c0_i32 = arith.constant 0 : i32
    %c0_i32_0 = arith.constant 0 : i32
    %c0_i32_1 = arith.constant 0 : i32
    return %arg0, %c0_i32, %c0_i32_0 : i32, i32, i32
  }
  func.func @transform_2(%arg0: i32) -> (i32, i32) {
    %c0_i32 = arith.constant 0 : i32
    %c0_i32_0 = arith.constant 0 : i32
    %c0_i32_1 = arith.constant 0 : i32
    return %c0_i32, %c0_i32_0 : i32, i32
  }
  func.func @transform_3(%arg0: i32) -> (i32, i32) {
    %c0_i32 = arith.constant 0 : i32
    %c0_i32_0 = arith.constant 0 : i32
    %c0_i32_1 = arith.constant 0 : i32
    return %c0_i32, %c0_i32_0 : i32, i32
  }
  func.func @transform_4(%arg0: i32) -> (i32, i32) {
    %c0_i32 = arith.constant 0 : i32
    %c0_i32_0 = arith.constant 0 : i32
    %c0_i32_1 = arith.constant 0 : i32
    return %c0_i32, %c0_i32_0 : i32, i32
  }
  func.func @transform_5(%arg0: i32) -> (i32, i32) {
    %c0_i32 = arith.constant 0 : i32
    %c0_i32_0 = arith.constant 0 : i32
    %c0_i32_1 = arith.constant 0 : i32
    return %c0_i32, %c0_i32_0 : i32, i32
  }
  func.func @transform_6(%arg0: i32) -> (i32, i32) {
    %c0_i32 = arith.constant 0 : i32
    %c0_i32_0 = arith.constant 0 : i32
    %c0_i32_1 = arith.constant 0 : i32
    return %c0_i32, %c0_i32_0 : i32, i32
  }
  func.func @transform_7(%arg0: i32) -> (i32, i32) {
    %c0_i32 = arith.constant 0 : i32
    %c0_i32_0 = arith.constant 0 : i32
    %c0_i32_1 = arith.constant 0 : i32
    return %c0_i32, %c0_i32_0 : i32, i32
  }
  func.func @transform_8(%arg0: i32) -> (i32, i32) {
    %c0_i32 = arith.constant 0 : i32
    %c0_i32_0 = arith.constant 0 : i32
    %c0_i32_1 = arith.constant 0 : i32
    return %c0_i32, %c0_i32_0 : i32, i32
  }
  func.func @transform_9(%arg0: i32) -> (i32, i32) {
    %c0_i32 = arith.constant 0 : i32
    %c0_i32_0 = arith.constant 0 : i32
    %c0_i32_1 = arith.constant 0 : i32
    return %c0_i32, %c0_i32_0 : i32, i32
  }
  func.func @transform_10(%arg0: i32) -> (i32, i32) {
    %c0_i32 = arith.constant 0 : i32
    %c0_i32_0 = arith.constant 0 : i32
    return %arg0, %c0_i32 : i32, i32
  }
}

</mosaic_0001>

<llo_original>
// kernel: tpu_custom_call.1
$region0: #{tpu_custom_call.1}
  #allocation0 [shape = 'u32[]', space=smem, size = 0x4, offset = 0x4, fixed_abs, tag = 'smem constant byte address 0x4 - core index']
  #allocation1 [shape = 'u32[144,128]{1,0:T(1,128)}', space=vmem, size = 0x12000, scoped, tag = 'internal scratch']
  %s0 = inlined_call_operand.vmem [shape: f32[2,32,64], index: 0, kind: input, shape index: {}]
  %s1 = inlined_call_operand.vmem [shape: f32[2,32,64], index: 1, kind: input, shape index: {}]
  %s2 = inlined_call_operand.hbm [shape: bf16[32,512], index: 2, kind: input, shape index: {}]
  %s3 = inlined_call_operand.hbm [shape: bf16[32,512], index: 3, kind: input, shape index: {}]
  %s4 = inlined_call_operand.hbm [shape: bf16[32,512], index: 4, kind: input, shape index: {}]
  %s5 = inlined_call_operand.vmem [shape: f32[1,512], index: 5, kind: input, shape index: {}]
  %s6 = inlined_call_operand.hbm [shape: bf16[512,256], index: 6, kind: input, shape index: {}]
  %s7 = inlined_call_operand.vmem [shape: f32[1,256], index: 7, kind: input, shape index: {}]
  %s8 = inlined_call_operand.vmem [shape: bf16[256,2], index: 8, kind: input, shape index: {}]
  %s9 = inlined_call_operand.vmem [shape: f32[1,2], index: 9, kind: input, shape index: {}]
  %s10 = inlined_call_operand.hbm [shape: f32[2,2], index: 10, kind: output, shape index: {}]
  %s11 = sld [smem:[#allocation0]]
  $region66: #{tpu_custom_call.1} parent=0
    _
  %s13 = ssub.s32 1, %s11
  %s14 = scalar_select 0, %s13, %s11
  $region1: #{tpu_custom_call.1} parent=0
    #allocation2 [shape = 'u8[32768]{0}', space=vmem, size = 0x8000, scoped, tag = 'input window, operand 2, single buffered']
    #allocation3 [shape = 's32[1]{0}', space=sflag, size = 0x4, scoped, tag = 'scoped memory for tpu_custom_call.1']
    #allocation4 [shape = 's32[1]{0}', space=sflag, size = 0x4, scoped, tag = 'scoped memory for tpu_custom_call.1']
    #allocation5 [shape = 'u8[32768]{0}', space=vmem, size = 0x8000, scoped, tag = 'input window, operand 3, single buffered']
    #allocation6 [shape = 's32[1]{0}', space=sflag, size = 0x4, scoped, tag = 'scoped memory for tpu_custom_call.1']
    #allocation7 [shape = 'u8[32768]{0}', space=vmem, size = 0x8000, scoped, tag = 'input window, operand 4, single buffered']
    #allocation8 [shape = 'u8[262144]{0}', space=vmem, size = 0x40000, scoped, tag = 'input window, operand 6, single buffered']
    #allocation9 [shape = 's32[1]{0}', space=sflag, size = 0x4, scoped, tag = 'scoped memory for tpu_custom_call.1']
    #allocation10 [shape = 'u8[1024]{0}', space=vmem, size = 0x400, scoped, tag = 'output window, operand 0, single buffered']
    %15 = vsyncpa [#allocation3], 0
    %16 = vsyncpa [#allocation6], 0
    %17 = vsyncpa [#allocation9], 0
    %18 = vsyncpa [#allocation4], 0
    // Predicated region
    $region2: #{tpu_custom_call.1} parent=1 // pred_check
      _
    $region3: #{tpu_custom_call.1} parent=1 // pred_check_branch
      %20 = sbr.rel (0) target = $region5
    $region4: #{tpu_custom_call.1} parent=1 // pred_region
      _
    $region5: #{tpu_custom_call.1} parent=1 // pred_fallthru
      _
    // Predicated region
    $region6: #{tpu_custom_call.1} parent=1 // pred_check
      _
    $region7: #{tpu_custom_call.1} parent=1 // pred_check_branch
      %22 = sbr.rel (0) target = $region9
    $region8: #{tpu_custom_call.1} parent=1 // pred_region
      _
    $region9: #{tpu_custom_call.1} parent=1 // pred_fallthru
      _
    // Predicated region
    $region10: #{tpu_custom_call.1} parent=1 // pred_check
      _
    $region11: #{tpu_custom_call.1} parent=1 // pred_check_branch
      %24 = sbr.rel (0) target = $region13
    $region12: #{tpu_custom_call.1} parent=1 // pred_region
      %s26 = ssub.s32 1024, 1024
      %27 = vsyncadd [#allocation3], %s26
      %s28 = sshll.u32 [#allocation2], 4
      %s29 = int_to_ptr.vmem [resolvable:$true] %s28
      %34 = dma.hbm_to_vmem [thread:$0]  %s2, 1024, %s29, [#allocation3], 256, 256, 16
    $region13: #{tpu_custom_call.1} parent=1 // pred_fallthru
      _
    // Predicated region
    $region14: #{tpu_custom_call.1} parent=1 // pred_check
      _
    $region15: #{tpu_custom_call.1} parent=1 // pred_check_branch
      %36 = sbr.rel (0) target = $region17
    $region16: #{tpu_custom_call.1} parent=1 // pred_region
      %s38 = ssub.s32 1024, 1024
      %39 = vsyncadd [#allocation6], %s38
      %s40 = sshll.u32 [#allocation5], 4
      %s41 = int_to_ptr.vmem [resolvable:$true] %s40
      %46 = dma.hbm_to_vmem [thread:$0]  %s3, 1024, %s41, [#allocation6], 256, 256, 16
    $region17: #{tpu_custom_call.1} parent=1 // pred_fallthru
      _
    // Predicated region
    $region18: #{tpu_custom_call.1} parent=1 // pred_check
      _
    $region19: #{tpu_custom_call.1} parent=1 // pred_check_branch
      %48 = sbr.rel (0) target = $region21
    $region20: #{tpu_custom_call.1} parent=1 // pred_region
      %s50 = ssub.s32 1024, 1024
      %51 = vsyncadd [#allocation6], %s50
      %s52 = sshll.u32 [#allocation7], 4
      %s53 = int_to_ptr.vmem [resolvable:$true] %s52
      %58 = dma.hbm_to_vmem [thread:$0]  %s4, 1024, %s53, [#allocation6], 256, 256, 16
    $region21: #{tpu_custom_call.1} parent=1 // pred_fallthru
      _
    // Predicated region
    $region22: #{tpu_custom_call.1} parent=1 // pred_check
      _
    $region23: #{tpu_custom_call.1} parent=1 // pred_check_branch
      %60 = sbr.rel (0) target = $region25
    $region24: #{tpu_custom_call.1} parent=1 // pred_region
      _
    $region25: #{tpu_custom_call.1} parent=1 // pred_fallthru
      _
    // Predicated region
    $region26: #{tpu_custom_call.1} parent=1 // pred_check
      _
    $region27: #{tpu_custom_call.1} parent=1 // pred_check_branch
      %62 = sbr.rel (0) target = $region29
    $region28: #{tpu_custom_call.1} parent=1 // pred_region
      %s64 = ssub.s32 8192, 8192
      %65 = vsyncadd [#allocation9], %s64
      %s66 = sshll.u32 [#allocation8], 4
      %s67 = int_to_ptr.vmem [resolvable:$true] %s66
      %72 = dma.hbm_to_vmem [thread:$0]  %s6, 8192, %s67, [#allocation9], 128, 128, 8
    $region29: #{tpu_custom_call.1} parent=1 // pred_fallthru
      _
    // Predicated region
    $region30: #{tpu_custom_call.1} parent=1 // pred_check
      _
    $region31: #{tpu_custom_call.1} parent=1 // pred_check_branch
      %74 = sbr.rel (0) target = $region33
    $region32: #{tpu_custom_call.1} parent=1 // pred_region
      _
    $region33: #{tpu_custom_call.1} parent=1 // pred_fallthru
      _
    // Predicated region
    $region34: #{tpu_custom_call.1} parent=1 // pred_check
      _
    $region35: #{tpu_custom_call.1} parent=1 // pred_check_branch
      %76 = sbr.rel (0) target = $region37
    $region36: #{tpu_custom_call.1} parent=1 // pred_region
      _
    $region37: #{tpu_custom_call.1} parent=1 // pred_fallthru
      _
    // Predicated region
    $region38: #{tpu_custom_call.1} parent=1 // pred_check
      _
    $region39: #{tpu_custom_call.1} parent=1 // pred_check_branch
      %78 = sbr.rel (0) target = $region41
    $region40: #{tpu_custom_call.1} parent=1 // pred_region
      _
    $region41: #{tpu_custom_call.1} parent=1 // pred_fallthru
      _
    // Predicated region
    $region42: #{tpu_custom_call.1} parent=1 // pred_check
      _
    $region43: #{tpu_custom_call.1} parent=1 // pred_check_branch
      %80 = sbr.rel (0) target = $region45
    $region44: #{tpu_custom_call.1} parent=1 // pred_region
      %81 = dma.done [#allocation3], 1024
    $region45: #{tpu_custom_call.1} parent=1 // pred_fallthru
      _
    // Predicated region
    $region46: #{tpu_custom_call.1} parent=1 // pred_check
      _
    $region47: #{tpu_custom_call.1} parent=1 // pred_check_branch
      %83 = sbr.rel (0) target = $region49
    $region48: #{tpu_custom_call.1} parent=1 // pred_region
      %84 = dma.done [#allocation6], 1024
    $region49: #{tpu_custom_call.1} parent=1 // pred_fallthru
      _
    // Predicated region
    $region50: #{tpu_custom_call.1} parent=1 // pred_check
      _
    $region51: #{tpu_custom_call.1} parent=1 // pred_check_branch
      %86 = sbr.rel (0) target = $region53
    $region52: #{tpu_custom_call.1} parent=1 // pred_region
      %87 = dma.done [#allocation6], 1024
    $region53: #{tpu_custom_call.1} parent=1 // pred_fallthru
      _
    // Predicated region
    $region54: #{tpu_custom_call.1} parent=1 // pred_check
      _
    $region55: #{tpu_custom_call.1} parent=1 // pred_check_branch
      %89 = sbr.rel (0) target = $region57
    $region56: #{tpu_custom_call.1} parent=1 // pred_region
      %90 = dma.done [#allocation9], 8192
    $region57: #{tpu_custom_call.1} parent=1 // pred_fallthru
      _
    %v92 = vld [vmem:[%s0] sm:$0xff]
    %v93 = vld [vmem:[%s0 + $0x8] sm:$0xff]
    %v94 = vld [vmem:[%s0 + $0x10] sm:$0xff]
    %v95 = vld [vmem:[%s0 + $0x18] sm:$0xff]
    %v96 = vld [vmem:[%s0 + $0x20] sm:$0xff]
    %v97 = vld [vmem:[%s0 + $0x28] sm:$0xff]
    %v98 = vld [vmem:[%s0 + $0x30] sm:$0xff]
    %v99 = vld [vmem:[%s0 + $0x38] sm:$0xff]
    %vm100 = vcmask 523264
    %v101 = vsel %vm100, %v92, 0.0
    %102 = vadd.xlane.f32.xlu0 %v101
    %v103 = vpop.xlane.xlu0 %102
    %v104 = vsel %vm100, %v93, 0.0
    %105 = vadd.xlane.f32.xlu0 %v104
    %v106 = vpop.xlane.xlu0 %105
    %v107 = vsel %vm100, %v94, 0.0
    %108 = vadd.xlane.f32.xlu0 %v107
    %v109 = vpop.xlane.xlu0 %108
    %v110 = vsel %vm100, %v95, 0.0
    %111 = vadd.xlane.f32.xlu0 %v110
    %v112 = vpop.xlane.xlu0 %111
    %v113 = vsel %vm100, %v96, 0.0
    %114 = vadd.xlane.f32.xlu0 %v113
    %v115 = vpop.xlane.xlu0 %114
    %v116 = vsel %vm100, %v97, 0.0
    %117 = vadd.xlane.f32.xlu0 %v116
    %v118 = vpop.xlane.xlu0 %117
    %v119 = vsel %vm100, %v98, 0.0
    %120 = vadd.xlane.f32.xlu0 %v119
    %v121 = vpop.xlane.xlu0 %120
    %v122 = vsel %vm100, %v99, 0.0
    %123 = vadd.xlane.f32.xlu0 %v122
    %v124 = vpop.xlane.xlu0 %123
    %v125 = vmul.f32 %v103, 0.015625
    %v126 = vmul.f32 %v106, 0.015625
    %v127 = vmul.f32 %v109, 0.015625
    %v128 = vmul.f32 %v112, 0.015625
    %v129 = vmul.f32 %v115, 0.015625
    %v130 = vmul.f32 %v118, 0.015625
    %v131 = vmul.f32 %v121, 0.015625
    %v132 = vmul.f32 %v124, 0.015625
    %v133 = vld [vmem:[%s1] sm:$0xff]
    %v134 = vld [vmem:[%s1 + $0x8] sm:$0xff]
    %v135 = vld [vmem:[%s1 + $0x10] sm:$0xff]
    %v136 = vld [vmem:[%s1 + $0x18] sm:$0xff]
    %v137 = vld [vmem:[%s1 + $0x20] sm:$0xff]
    %v138 = vld [vmem:[%s1 + $0x28] sm:$0xff]
    %v139 = vld [vmem:[%s1 + $0x30] sm:$0xff]
    %v140 = vld [vmem:[%s1 + $0x38] sm:$0xff]
    %v141 = vsel %vm100, %v133, 0.0
    %142 = vadd.xlane.f32.xlu0 %v141
    %v143 = vpop.xlane.xlu0 %142
    %v144 = vsel %vm100, %v134, 0.0
    %145 = vadd.xlane.f32.xlu0 %v144
    %v146 = vpop.xlane.xlu0 %145
    %v147 = vsel %vm100, %v135, 0.0
    %148 = vadd.xlane.f32.xlu0 %v147
    %v149 = vpop.xlane.xlu0 %148
    %v150 = vsel %vm100, %v136, 0.0
    %151 = vadd.xlane.f32.xlu0 %v150
    %v152 = vpop.xlane.xlu0 %151
    %v153 = vsel %vm100, %v137, 0.0
    %154 = vadd.xlane.f32.xlu0 %v153
    %v155 = vpop.xlane.xlu0 %154
    %v156 = vsel %vm100, %v138, 0.0
    %157 = vadd.xlane.f32.xlu0 %v156
    %v158 = vpop.xlane.xlu0 %157
    %v159 = vsel %vm100, %v139, 0.0
    %160 = vadd.xlane.f32.xlu0 %v159
    %v161 = vpop.xlane.xlu0 %160
    %v162 = vsel %vm100, %v140, 0.0
    %163 = vadd.xlane.f32.xlu0 %v162
    %v164 = vpop.xlane.xlu0 %163
    %v165 = vmul.f32 %v143, 0.015625
    %v166 = vmul.f32 %v146, 0.015625
    %v167 = vmul.f32 %v149, 0.015625
    %v168 = vmul.f32 %v152, 0.015625
    %v169 = vmul.f32 %v155, 0.015625
    %v170 = vmul.f32 %v158, 0.015625
    %v171 = vmul.f32 %v161, 0.015625
    %v172 = vmul.f32 %v164, 0.015625
    %v173 = vsub.f32 %v125, %v165
    %v174 = vsub.f32 %v126, %v166
    %v175 = vsub.f32 %v127, %v167
    %v176 = vsub.f32 %v128, %v168
    %v177 = vsub.f32 %v129, %v169
    %v178 = vsub.f32 %v130, %v170
    %v179 = vsub.f32 %v131, %v171
    %v180 = vsub.f32 %v132, %v172
    %v181 = vand.u32 2147483647, %v173
    %v182 = vand.u32 2147483647, %v174
    %v183 = vand.u32 2147483647, %v175
    %v184 = vand.u32 2147483647, %v176
    %v185 = vand.u32 2147483647, %v177
    %v186 = vand.u32 2147483647, %v178
    %v187 = vand.u32 2147483647, %v179
    %v188 = vand.u32 2147483647, %v180
    %v189 = vpack.c.bf16 %v126, %v125
    %v190 = vpack.c.bf16 %v128, %v127
    %v191 = vpack.c.bf16 %v130, %v129
    %v192 = vpack.c.bf16 %v132, %v131
    %v193 = vpack.c.bf16 %v166, %v165
    %v194 = vpack.c.bf16 %v168, %v167
    %v195 = vpack.c.bf16 %v170, %v169
    %v196 = vpack.c.bf16 %v172, %v171
    %v197 = vpack.c.bf16 %v182, %v181
    %v198 = vpack.c.bf16 %v184, %v183
    %v199 = vpack.c.bf16 %v186, %v185
    %v200 = vpack.c.bf16 %v188, %v187
    %v201 = vld [vmem:[#allocation2] sm:$0xff]
    %v202 = vld [vmem:[#allocation2 + $0x8] sm:$0xff]
    %v203 = vld [vmem:[#allocation2 + $0x10] sm:$0xff]
    %v204 = vld [vmem:[#allocation2 + $0x18] sm:$0xff]
    %v205 = vld [vmem:[#allocation2 + $0x20] sm:$0xff]
    %v206 = vld [vmem:[#allocation2 + $0x28] sm:$0xff]
    %v207 = vld [vmem:[#allocation2 + $0x30] sm:$0xff]
    %v208 = vld [vmem:[#allocation2 + $0x38] sm:$0xff]
    %v209 = vld [vmem:[#allocation5] sm:$0xff]
    %v210 = vld [vmem:[#allocation5 + $0x8] sm:$0xff]
    %v211 = vld [vmem:[#allocation5 + $0x10] sm:$0xff]
    %v212 = vld [vmem:[#allocation5 + $0x18] sm:$0xff]
    %v213 = vld [vmem:[#allocation5 + $0x20] sm:$0xff]
    %v214 = vld [vmem:[#allocation5 + $0x28] sm:$0xff]
    %v215 = vld [vmem:[#allocation5 + $0x30] sm:$0xff]
    %v216 = vld [vmem:[#allocation5 + $0x38] sm:$0xff]
    %v221 = vunpack.c.l.b16 %v193
    %v222 = vunpack.c.h.b16 %v193
    %v223 = vunpack.c.l.b16 %v194
    %v224 = vunpack.c.h.b16 %v194
    %v225 = vunpack.c.l.b16 %v195
    %v226 = vunpack.c.h.b16 %v195
    %v227 = vunpack.c.l.b16 %v196
    %v228 = vunpack.c.h.b16 %v196
    %v229 = vlaneseq
    %v230 = vand.u32 %v229, 127
    %v231 = vlaneseq
    %v232 = vshrl.u32 %v231, 7
    %v233 = vsub.s32 %v230, %v232
    %v234 = vrot.slane %v221, %v233
    %v235 = vadd.s32 %v230, 4294967288
    %v236 = vlaneseq
    %v237 = vshrl.u32 %v236, 7
    %v238 = vsub.s32 %v235, %v237
    %v239 = vrot.slane %v222, %v238
    %vm240 = vcmask 130112
    %v241 = vsel %vm240, %v239, %v234
    %v242 = vadd.s32 %v230, 4294967280
    %v243 = vlaneseq
    %v244 = vshrl.u32 %v243, 7
    %v245 = vsub.s32 %v242, %v244
    %v246 = vrot.slane %v223, %v245
    %vm247 = vcmask 195712
    %v248 = vsel %vm247, %v246, %v241
    %v249 = vadd.s32 %v230, 4294967272
    %v250 = vlaneseq
    %v251 = vshrl.u32 %v250, 7
    %v252 = vsub.s32 %v249, %v251
    %v253 = vrot.slane %v224, %v252
    %vm254 = vcmask 261312
    %v255 = vsel %vm254, %v253, %v248
    %v256 = vlaneseq
    %v257 = vshrl.u32 %v256, 7
    %v258 = vsub.s32 %v230, %v257
    %v259 = vrot.slane %v225, %v258
    %v260 = vlaneseq
    %v261 = vshrl.u32 %v260, 7
    %v262 = vsub.s32 %v235, %v261
    %v263 = vrot.slane %v226, %v262
    %v264 = vsel %vm240, %v263, %v259
    %v265 = vlaneseq
    %v266 = vshrl.u32 %v265, 7
    %v267 = vsub.s32 %v242, %v266
    %v268 = vrot.slane %v227, %v267
    %v269 = vsel %vm247, %v268, %v264
    %v270 = vlaneseq
    %v271 = vshrl.u32 %v270, 7
    %v272 = vsub.s32 %v249, %v271
    %v273 = vrot.slane %v228, %v272
    %v274 = vsel %vm254, %v273, %v269
    %vm275 = vcmask 1041409
    %v276 = vsel %vm275, %v274, %v255
    %v277 = vpack.c.b16 %v276, %v276
    %v286 = vunpack.c.l.b16 %v209
    %v287 = vunpack.c.h.b16 %v209
    %v288 = vunpack.c.l.b16 %v210
    %v289 = vunpack.c.h.b16 %v210
    %v290 = vunpack.c.l.b16 %v211
    %v291 = vunpack.c.h.b16 %v211
    %v292 = vunpack.c.l.b16 %v212
    %v293 = vunpack.c.h.b16 %v212
    %v294 = vunpack.c.l.b16 %v213
    %v295 = vunpack.c.h.b16 %v213
    %v296 = vunpack.c.l.b16 %v214
    %v297 = vunpack.c.h.b16 %v214
    %v298 = vunpack.c.l.b16 %v215
    %v299 = vunpack.c.h.b16 %v215
    %v300 = vunpack.c.l.b16 %v216
    %v301 = vunpack.c.h.b16 %v216
    %v302 = vpack.c.b16 %v290, %v286
    %v303 = vpack.c.b16 %v291, %v287
    %v304 = vpack.c.b16 %v292, %v288
    %v305 = vpack.c.b16 %v293, %v289
    %v306 = vpack.c.b16 %v298, %v294
    %v307 = vpack.c.b16 %v299, %v295
    %v308 = vpack.c.b16 %v300, %v296
    %v309 = vpack.c.b16 %v301, %v297
    %vm318 = vcmask 261120
    %v320 = vsel %vm318, %v277, 0
    %322 = vmatprep.subr.bf16.mxu0 0
    %323 = vmatpush1.bf16.msra.mxu0 0
    %324 = vmatprep.subr.bf16.mxu0 0
    %325 = vmatpush1.bf16.msra.mxu0 0
    %326 = vmatprep.subr.bf16.mxu0 0
    %327 = vmatpush1.bf16.msra.mxu0 0
    %328 = vmatprep.subr.bf16.mxu0 0
    %329 = vmatpush1.bf16.msra.mxu0 0
    %330 = vmatprep.subr.bf16.mxu0 0
    %331 = vmatpush1.bf16.msra.mxu0 0
    %332 = vmatprep.subr.bf16.mxu0 0
    %333 = vmatpush1.bf16.msra.mxu0 0
    %334 = vmatprep.subr.bf16.mxu0 %v307
    %335 = vmatpush1.bf16.msra.mxu0 %v306
    %336 = vmatprep.subr.bf16.mxu0 %v303
    %337 = vmatpush1.bf16.msra.mxu0 %v302
    %338 = vmatprep.subr.bf16.mxu0 0
    %339 = vmatpush2.bf16.msra.mxu0 0
    %340 = vmatprep.subr.bf16.mxu0 0
    %341 = vmatpush2.bf16.msra.mxu0 0
    %342 = vmatprep.subr.bf16.mxu0 0
    %343 = vmatpush2.bf16.msra.mxu0 0
    %344 = vmatprep.subr.bf16.mxu0 0
    %345 = vmatpush2.bf16.msra.mxu0 0
    %346 = vmatprep.subr.bf16.mxu0 0
    %347 = vmatpush2.bf16.msra.mxu0 0
    %348 = vmatprep.subr.bf16.mxu0 0
    %349 = vmatpush2.bf16.msra.mxu0 0
    %350 = vmatprep.subr.bf16.mxu0 0
    %351 = vmatpush2.bf16.msra.mxu0 0
    %352 = vmatprep.subr.bf16.mxu0 0
    %353 = vmatpush2.bf16.msra.mxu0 0
    %354 = vmatprep.mubr.bf16.mxu0 0
    %355 = vmatmul.mubr.bf16.gmra.mxu0 %v320
    %v356 = vpop.f32.mrf.mxu0
    %v357 = vadd.f32 0.0, %v356
    %v358 = vpop.f32.mrf.mxu0
    %v359 = vadd.f32 0.0, %v358
    %v360 = vpop.f32.mrf.mxu0
    %v361 = vpop.f32.mrf.mxu0
    %362 = vdwg.mxu0
    %363 = vmatprep.subr.bf16.mxu0 0
    %364 = vmatpush1.bf16.msra.mxu0 0
    %365 = vmatprep.subr.bf16.mxu0 0
    %366 = vmatpush1.bf16.msra.mxu0 0
    %367 = vmatprep.subr.bf16.mxu0 0
    %368 = vmatpush1.bf16.msra.mxu0 0
    %369 = vmatprep.subr.bf16.mxu0 0
    %370 = vmatpush1.bf16.msra.mxu0 0
    %371 = vmatprep.subr.bf16.mxu0 0
    %372 = vmatpush1.bf16.msra.mxu0 0
    %373 = vmatprep.subr.bf16.mxu0 0
    %374 = vmatpush1.bf16.msra.mxu0 0
    %375 = vmatprep.subr.bf16.mxu0 %v309
    %376 = vmatpush1.bf16.msra.mxu0 %v308
    %377 = vmatprep.subr.bf16.mxu0 %v305
    %378 = vmatpush1.bf16.msra.mxu0 %v304
    %379 = vmatprep.subr.bf16.mxu0 0
    %380 = vmatpush2.bf16.msra.mxu0 0
    %381 = vmatprep.subr.bf16.mxu0 0
    %382 = vmatpush2.bf16.msra.mxu0 0
    %383 = vmatprep.subr.bf16.mxu0 0
    %384 = vmatpush2.bf16.msra.mxu0 0
    %385 = vmatprep.subr.bf16.mxu0 0
    %386 = vmatpush2.bf16.msra.mxu0 0
    %387 = vmatprep.subr.bf16.mxu0 0
    %388 = vmatpush2.bf16.msra.mxu0 0
    %389 = vmatprep.subr.bf16.mxu0 0
    %390 = vmatpush2.bf16.msra.mxu0 0
    %391 = vmatprep.subr.bf16.mxu0 0
    %392 = vmatpush2.bf16.msra.mxu0 0
    %393 = vmatprep.subr.bf16.mxu0 0
    %394 = vmatpush2.bf16.msra.mxu0 0
    %395 = vmatprep.mubr.bf16.mxu0 0
    %396 = vmatmul.mubr.bf16.gmra.mxu0 %v320
    %v397 = vpop.f32.mrf.mxu0
    %v398 = vadd.f32 0.0, %v397
    %v399 = vpop.f32.mrf.mxu0
    %v400 = vadd.f32 0.0, %v399
    %v401 = vpop.f32.mrf.mxu0
    %v402 = vpop.f32.mrf.mxu0
    %403 = vdwg.mxu0
    %v408 = vunpack.c.l.b16 %v189
    %v409 = vunpack.c.h.b16 %v189
    %v410 = vunpack.c.l.b16 %v190
    %v411 = vunpack.c.h.b16 %v190
    %v412 = vunpack.c.l.b16 %v191
    %v413 = vunpack.c.h.b16 %v191
    %v414 = vunpack.c.l.b16 %v192
    %v415 = vunpack.c.h.b16 %v192
    %v416 = vlaneseq
    %v417 = vshrl.u32 %v416, 7
    %v418 = vsub.s32 %v230, %v417
    %v419 = vrot.slane %v408, %v418
    %v420 = vlaneseq
    %v421 = vshrl.u32 %v420, 7
    %v422 = vsub.s32 %v235, %v421
    %v423 = vrot.slane %v409, %v422
    %v424 = vsel %vm240, %v423, %v419
    %v425 = vlaneseq
    %v426 = vshrl.u32 %v425, 7
    %v427 = vsub.s32 %v242, %v426
    %v428 = vrot.slane %v410, %v427
    %v429 = vsel %vm247, %v428, %v424
    %v430 = vlaneseq
    %v431 = vshrl.u32 %v430, 7
    %v432 = vsub.s32 %v249, %v431
    %v433 = vrot.slane %v411, %v432
    %v434 = vsel %vm254, %v433, %v429
    %v435 = vlaneseq
    %v436 = vshrl.u32 %v435, 7
    %v437 = vsub.s32 %v230, %v436
    %v438 = vrot.slane %v412, %v437
    %v439 = vlaneseq
    %v440 = vshrl.u32 %v439, 7
    %v441 = vsub.s32 %v235, %v440
    %v442 = vrot.slane %v413, %v441
    %v443 = vsel %vm240, %v442, %v438
    %v444 = vlaneseq
    %v445 = vshrl.u32 %v444, 7
    %v446 = vsub.s32 %v242, %v445
    %v447 = vrot.slane %v414, %v446
    %v448 = vsel %vm247, %v447, %v443
    %v449 = vlaneseq
    %v450 = vshrl.u32 %v449, 7
    %v451 = vsub.s32 %v249, %v450
    %v452 = vrot.slane %v415, %v451
    %v453 = vsel %vm254, %v452, %v448
    %v454 = vsel %vm275, %v453, %v434
    %v455 = vpack.c.b16 %v454, %v454
    %v464 = vunpack.c.l.b16 %v201
    %v465 = vunpack.c.h.b16 %v201
    %v466 = vunpack.c.l.b16 %v202
    %v467 = vunpack.c.h.b16 %v202
    %v468 = vunpack.c.l.b16 %v203
    %v469 = vunpack.c.h.b16 %v203
    %v470 = vunpack.c.l.b16 %v204
    %v471 = vunpack.c.h.b16 %v204
    %v472 = vunpack.c.l.b16 %v205
    %v473 = vunpack.c.h.b16 %v205
    %v474 = vunpack.c.l.b16 %v206
    %v475 = vunpack.c.h.b16 %v206
    %v476 = vunpack.c.l.b16 %v207
    %v477 = vunpack.c.h.b16 %v207
    %v478 = vunpack.c.l.b16 %v208
    %v479 = vunpack.c.h.b16 %v208
    %v480 = vpack.c.b16 %v468, %v464
    %v481 = vpack.c.b16 %v469, %v465
    %v482 = vpack.c.b16 %v470, %v466
    %v483 = vpack.c.b16 %v471, %v467
    %v484 = vpack.c.b16 %v476, %v472
    %v485 = vpack.c.b16 %v477, %v473
    %v486 = vpack.c.b16 %v478, %v474
    %v487 = vpack.c.b16 %v479, %v475
    %v497 = vsel %vm318, %v455, 0
    %499 = vmatprep.subr.bf16.mxu0 0
    %500 = vmatpush1.bf16.msra.mxu0 0
    %501 = vmatprep.subr.bf16.mxu0 0
    %502 = vmatpush1.bf16.msra.mxu0 0
    %503 = vmatprep.subr.bf16.mxu0 0
    %504 = vmatpush1.bf16.msra.mxu0 0
    %505 = vmatprep.subr.bf16.mxu0 0
    %506 = vmatpush1.bf16.msra.mxu0 0
    %507 = vmatprep.subr.bf16.mxu0 0
    %508 = vmatpush1.bf16.msra.mxu0 0
    %509 = vmatprep.subr.bf16.mxu0 0
    %510 = vmatpush1.bf16.msra.mxu0 0
    %511 = vmatprep.subr.bf16.mxu0 %v485
    %512 = vmatpush1.bf16.msra.mxu0 %v484
    %513 = vmatprep.subr.bf16.mxu0 %v481
    %514 = vmatpush1.bf16.msra.mxu0 %v480
    %515 = vmatprep.subr.bf16.mxu0 0
    %516 = vmatpush2.bf16.msra.mxu0 0
    %517 = vmatprep.subr.bf16.mxu0 0
    %518 = vmatpush2.bf16.msra.mxu0 0
    %519 = vmatprep.subr.bf16.mxu0 0
    %520 = vmatpush2.bf16.msra.mxu0 0
    %521 = vmatprep.subr.bf16.mxu0 0
    %522 = vmatpush2.bf16.msra.mxu0 0
    %523 = vmatprep.subr.bf16.mxu0 0
    %524 = vmatpush2.bf16.msra.mxu0 0
    %525 = vmatprep.subr.bf16.mxu0 0
    %526 = vmatpush2.bf16.msra.mxu0 0
    %527 = vmatprep.subr.bf16.mxu0 0
    %528 = vmatpush2.bf16.msra.mxu0 0
    %529 = vmatprep.subr.bf16.mxu0 0
    %530 = vmatpush2.bf16.msra.mxu0 0
    %531 = vmatprep.mubr.bf16.mxu0 0
    %532 = vmatmul.mubr.bf16.gmra.mxu0 %v497
    %v533 = vpop.f32.mrf.mxu0
    %v534 = vadd.f32 %v357, %v533
    %v535 = vpop.f32.mrf.mxu0
    %v536 = vadd.f32 %v359, %v535
    %v537 = vpop.f32.mrf.mxu0
    %v538 = vpop.f32.mrf.mxu0
    %539 = vdwg.mxu0
    %540 = vmatprep.subr.bf16.mxu0 0
    %541 = vmatpush1.bf16.msra.mxu0 0
    %542 = vmatprep.subr.bf16.mxu0 0
    %543 = vmatpush1.bf16.msra.mxu0 0
    %544 = vmatprep.subr.bf16.mxu0 0
    %545 = vmatpush1.bf16.msra.mxu0 0
    %546 = vmatprep.subr.bf16.mxu0 0
    %547 = vmatpush1.bf16.msra.mxu0 0
    %548 = vmatprep.subr.bf16.mxu0 0
    %549 = vmatpush1.bf16.msra.mxu0 0
    %550 = vmatprep.subr.bf16.mxu0 0
    %551 = vmatpush1.bf16.msra.mxu0 0
    %552 = vmatprep.subr.bf16.mxu0 %v487
    %553 = vmatpush1.bf16.msra.mxu0 %v486
    %554 = vmatprep.subr.bf16.mxu0 %v483
    %555 = vmatpush1.bf16.msra.mxu0 %v482
    %556 = vmatprep.subr.bf16.mxu0 0
    %557 = vmatpush2.bf16.msra.mxu0 0
    %558 = vmatprep.subr.bf16.mxu0 0
    %559 = vmatpush2.bf16.msra.mxu0 0
    %560 = vmatprep.subr.bf16.mxu0 0
    %561 = vmatpush2.bf16.msra.mxu0 0
    %562 = vmatprep.subr.bf16.mxu0 0
    %563 = vmatpush2.bf16.msra.mxu0 0
    %564 = vmatprep.subr.bf16.mxu0 0
    %565 = vmatpush2.bf16.msra.mxu0 0
    %566 = vmatprep.subr.bf16.mxu0 0
    %567 = vmatpush2.bf16.msra.mxu0 0
    %568 = vmatprep.subr.bf16.mxu0 0
    %569 = vmatpush2.bf16.msra.mxu0 0
    %570 = vmatprep.subr.bf16.mxu0 0
    %571 = vmatpush2.bf16.msra.mxu0 0
    %572 = vmatprep.mubr.bf16.mxu0 0
    %573 = vmatmul.mubr.bf16.gmra.mxu0 %v497
    %v574 = vpop.f32.mrf.mxu0
    %v575 = vadd.f32 %v398, %v574
    %v576 = vpop.f32.mrf.mxu0
    %v577 = vadd.f32 %v400, %v576
    %v578 = vpop.f32.mrf.mxu0
    %v579 = vpop.f32.mrf.mxu0
    %580 = vdwg.mxu0
    %v581 = vld [vmem:[#allocation7] sm:$0xff]
    %v582 = vld [vmem:[#allocation7 + $0x8] sm:$0xff]
    %v583 = vld [vmem:[#allocation7 + $0x10] sm:$0xff]
    %v584 = vld [vmem:[#allocation7 + $0x18] sm:$0xff]
    %v585 = vld [vmem:[#allocation7 + $0x20] sm:$0xff]
    %v586 = vld [vmem:[#allocation7 + $0x28] sm:$0xff]
    %v587 = vld [vmem:[#allocation7 + $0x30] sm:$0xff]
    %v588 = vld [vmem:[#allocation7 + $0x38] sm:$0xff]
    %v593 = vunpack.c.l.b16 %v197
    %v594 = vunpack.c.h.b16 %v197
    %v595 = vunpack.c.l.b16 %v198
    %v596 = vunpack.c.h.b16 %v198
    %v597 = vunpack.c.l.b16 %v199
    %v598 = vunpack.c.h.b16 %v199
    %v599 = vunpack.c.l.b16 %v200
    %v600 = vunpack.c.h.b16 %v200
    %v601 = vlaneseq
    %v602 = vshrl.u32 %v601, 7
    %v603 = vsub.s32 %v230, %v602
    %v604 = vrot.slane %v593, %v603
    %v605 = vlaneseq
    %v606 = vshrl.u32 %v605, 7
    %v607 = vsub.s32 %v235, %v606
    %v608 = vrot.slane %v594, %v607
    %v609 = vsel %vm240, %v608, %v604
    %v610 = vlaneseq
    %v611 = vshrl.u32 %v610, 7
    %v612 = vsub.s32 %v242, %v611
    %v613 = vrot.slane %v595, %v612
    %v614 = vsel %vm247, %v613, %v609
    %v615 = vlaneseq
    %v616 = vshrl.u32 %v615, 7
    %v617 = vsub.s32 %v249, %v616
    %v618 = vrot.slane %v596, %v617
    %v619 = vsel %vm254, %v618, %v614
    %v620 = vlaneseq
    %v621 = vshrl.u32 %v620, 7
    %v622 = vsub.s32 %v230, %v621
    %v623 = vrot.slane %v597, %v622
    %v624 = vlaneseq
    %v625 = vshrl.u32 %v624, 7
    %v626 = vsub.s32 %v235, %v625
    %v627 = vrot.slane %v598, %v626
    %v628 = vsel %vm240, %v627, %v623
    %v629 = vlaneseq
    %v630 = vshrl.u32 %v629, 7
    %v631 = vsub.s32 %v242, %v630
    %v632 = vrot.slane %v599, %v631
    %v633 = vsel %vm247, %v632, %v628
    %v634 = vlaneseq
    %v635 = vshrl.u32 %v634, 7
    %v636 = vsub.s32 %v249, %v635
    %v637 = vrot.slane %v600, %v636
    %v638 = vsel %vm254, %v637, %v633
    %v639 = vsel %vm275, %v638, %v619
    %v640 = vpack.c.b16 %v639, %v639
    %v649 = vunpack.c.l.b16 %v581
    %v650 = vunpack.c.h.b16 %v581
    %v651 = vunpack.c.l.b16 %v582
    %v652 = vunpack.c.h.b16 %v582
    %v653 = vunpack.c.l.b16 %v583
    %v654 = vunpack.c.h.b16 %v583
    %v655 = vunpack.c.l.b16 %v584
    %v656 = vunpack.c.h.b16 %v584
    %v657 = vunpack.c.l.b16 %v585
    %v658 = vunpack.c.h.b16 %v585
    %v659 = vunpack.c.l.b16 %v586
    %v660 = vunpack.c.h.b16 %v586
    %v661 = vunpack.c.l.b16 %v587
    %v662 = vunpack.c.h.b16 %v587
    %v663 = vunpack.c.l.b16 %v588
    %v664 = vunpack.c.h.b16 %v588
    %v665 = vpack.c.b16 %v653, %v649
    %v666 = vpack.c.b16 %v654, %v650
    %v667 = vpack.c.b16 %v655, %v651
    %v668 = vpack.c.b16 %v656, %v652
    %v669 = vpack.c.b16 %v661, %v657
    %v670 = vpack.c.b16 %v662, %v658
    %v671 = vpack.c.b16 %v663, %v659
    %v672 = vpack.c.b16 %v664, %v660
    %v682 = vsel %vm318, %v640, 0
    %684 = vmatprep.subr.bf16.mxu0 0
    %685 = vmatpush1.bf16.msra.mxu0 0
    %686 = vmatprep.subr.bf16.mxu0 0
    %687 = vmatpush1.bf16.msra.mxu0 0
    %688 = vmatprep.subr.bf16.mxu0 0
    %689 = vmatpush1.bf16.msra.mxu0 0
    %690 = vmatprep.subr.bf16.mxu0 0
    %691 = vmatpush1.bf16.msra.mxu0 0
    %692 = vmatprep.subr.bf16.mxu0 0
    %693 = vmatpush1.bf16.msra.mxu0 0
    %694 = vmatprep.subr.bf16.mxu0 0
    %695 = vmatpush1.bf16.msra.mxu0 0
    %696 = vmatprep.subr.bf16.mxu0 %v670
    %697 = vmatpush1.bf16.msra.mxu0 %v669
    %698 = vmatprep.subr.bf16.mxu0 %v666
    %699 = vmatpush1.bf16.msra.mxu0 %v665
    %700 = vmatprep.subr.bf16.mxu0 0
    %701 = vmatpush2.bf16.msra.mxu0 0
    %702 = vmatprep.subr.bf16.mxu0 0
    %703 = vmatpush2.bf16.msra.mxu0 0
    %704 = vmatprep.subr.bf16.mxu0 0
    %705 = vmatpush2.bf16.msra.mxu0 0
    %706 = vmatprep.subr.bf16.mxu0 0
    %707 = vmatpush2.bf16.msra.mxu0 0
    %708 = vmatprep.subr.bf16.mxu0 0
    %709 = vmatpush2.bf16.msra.mxu0 0
    %710 = vmatprep.subr.bf16.mxu0 0
    %711 = vmatpush2.bf16.msra.mxu0 0
    %712 = vmatprep.subr.bf16.mxu0 0
    %713 = vmatpush2.bf16.msra.mxu0 0
    %714 = vmatprep.subr.bf16.mxu0 0
    %715 = vmatpush2.bf16.msra.mxu0 0
    %716 = vmatprep.mubr.bf16.mxu0 0
    %717 = vmatmul.mubr.bf16.gmra.mxu0 %v682
    %v718 = vpop.f32.mrf.mxu0
    %v719 = vadd.f32 0.0, %v718
    %v720 = vpop.f32.mrf.mxu0
    %v721 = vadd.f32 0.0, %v720
    %v722 = vpop.f32.mrf.mxu0
    %v723 = vpop.f32.mrf.mxu0
    %724 = vdwg.mxu0
    %725 = vmatprep.subr.bf16.mxu0 0
    %726 = vmatpush1.bf16.msra.mxu0 0
    %727 = vmatprep.subr.bf16.mxu0 0
    %728 = vmatpush1.bf16.msra.mxu0 0
    %729 = vmatprep.subr.bf16.mxu0 0
    %730 = vmatpush1.bf16.msra.mxu0 0
    %731 = vmatprep.subr.bf16.mxu0 0
    %732 = vmatpush1.bf16.msra.mxu0 0
    %733 = vmatprep.subr.bf16.mxu0 0
    %734 = vmatpush1.bf16.msra.mxu0 0
    %735 = vmatprep.subr.bf16.mxu0 0
    %736 = vmatpush1.bf16.msra.mxu0 0
    %737 = vmatprep.subr.bf16.mxu0 %v672
    %738 = vmatpush1.bf16.msra.mxu0 %v671
    %739 = vmatprep.subr.bf16.mxu0 %v668
    %740 = vmatpush1.bf16.msra.mxu0 %v667
    %741 = vmatprep.subr.bf16.mxu0 0
    %742 = vmatpush2.bf16.msra.mxu0 0
    %743 = vmatprep.subr.bf16.mxu0 0
    %744 = vmatpush2.bf16.msra.mxu0 0
    %745 = vmatprep.subr.bf16.mxu0 0
    %746 = vmatpush2.bf16.msra.mxu0 0
    %747 = vmatprep.subr.bf16.mxu0 0
    %748 = vmatpush2.bf16.msra.mxu0 0
    %749 = vmatprep.subr.bf16.mxu0 0
    %750 = vmatpush2.bf16.msra.mxu0 0
    %751 = vmatprep.subr.bf16.mxu0 0
    %752 = vmatpush2.bf16.msra.mxu0 0
    %753 = vmatprep.subr.bf16.mxu0 0
    %754 = vmatpush2.bf16.msra.mxu0 0
    %755 = vmatprep.subr.bf16.mxu0 0
    %756 = vmatpush2.bf16.msra.mxu0 0
    %757 = vmatprep.mubr.bf16.mxu0 0
    %758 = vmatmul.mubr.bf16.gmra.mxu0 %v682
    %v759 = vpop.f32.mrf.mxu0
    %v760 = vadd.f32 0.0, %v759
    %v761 = vpop.f32.mrf.mxu0
    %v762 = vadd.f32 0.0, %v761
    %v763 = vpop.f32.mrf.mxu0
    %v764 = vpop.f32.mrf.mxu0
    %765 = vdwg.mxu0
    %v766 = vadd.f32 %v534, %v719
    %v767 = vadd.f32 %v536, %v721
    %v768 = vadd.f32 %v575, %v760
    %v769 = vadd.f32 %v577, %v762
    %v770 = vld [vmem:[%s5] sm:$0xf]
    %v772 = vlaneseq
    %v773 = vshrl.u32 %v772, 7
    %v774 = vsub.s32 0, %v773
    %v775 = vrot.slane %v770, %v774
    %v776 = vlaneseq
    %v777 = vshrl.u32 %v776, 7
    %v778 = vsub.s32 1, %v777
    %v779 = vrot.slane %v770, %v778
    %v780 = vlaneseq
    %v781 = vshrl.u32 %v780, 7
    %v782 = vsub.s32 2, %v781
    %v783 = vrot.slane %v770, %v782
    %v784 = vlaneseq
    %v785 = vshrl.u32 %v784, 7
    %v786 = vsub.s32 3, %v785
    %v787 = vrot.slane %v770, %v786
    %v792 = vadd.f32 %v766, %v775
    %v793 = vadd.f32 %v767, %v779
    %v794 = vadd.f32 %v768, %v783
    %v795 = vadd.f32 %v769, %v787
    %vm796 = vcmp.ge.f32.partialorder %v792, 0.0
    %vm797 = vcmp.ge.f32.partialorder %v793, 0.0
    %vm798 = vcmp.ge.f32.partialorder %v794, 0.0
    %vm799 = vcmp.ge.f32.partialorder %v795, 0.0
    %v800 = vmul.f32 %v792, 0.01
    %v801 = vmul.f32 %v793, 0.01
    %v802 = vmul.f32 %v794, 0.01
    %v803 = vmul.f32 %v795, 0.01
    %v804 = vsel %vm796, %v792, %v800
    %v805 = vsel %vm797, %v793, %v801
    %v806 = vsel %vm798, %v794, %v802
    %v807 = vsel %vm799, %v795, %v803
    %v808 = vpack.c.bf16 %v804, %v804
    %v809 = vpack.c.bf16 %v805, %v805
    %v810 = vpack.c.bf16 %v806, %v806
    %v811 = vpack.c.bf16 %v807, %v807
    %v812 = vld [vmem:[#allocation8] sm:$0xff]
    %v813 = vld [vmem:[#allocation8 + $0x8] sm:$0xff]
    %v814 = vld [vmem:[#allocation8 + $0x10] sm:$0xff]
    %v815 = vld [vmem:[#allocation8 + $0x18] sm:$0xff]
    %v816 = vld [vmem:[#allocation8 + $0x20] sm:$0xff]
    %v817 = vld [vmem:[#allocation8 + $0x28] sm:$0xff]
    %v818 = vld [vmem:[#allocation8 + $0x30] sm:$0xff]
    %v819 = vld [vmem:[#allocation8 + $0x38] sm:$0xff]
    %v820 = vld [vmem:[#allocation8 + $0x40] sm:$0xff]
    %v821 = vld [vmem:[#allocation8 + $0x48] sm:$0xff]
    %v822 = vld [vmem:[#allocation8 + $0x50] sm:$0xff]
    %v823 = vld [vmem:[#allocation8 + $0x58] sm:$0xff]
    %v824 = vld [vmem:[#allocation8 + $0x60] sm:$0xff]
    %v825 = vld [vmem:[#allocation8 + $0x68] sm:$0xff]
    %v826 = vld [vmem:[#allocation8 + $0x70] sm:$0xff]
    %v827 = vld [vmem:[#allocation8 + $0x78] sm:$0xff]
    %v828 = vld [vmem:[#allocation8 + $0x80] sm:$0xff]
    %v829 = vld [vmem:[#allocation8 + $0x88] sm:$0xff]
    %v830 = vld [vmem:[#allocation8 + $0x90] sm:$0xff]
    %v831 = vld [vmem:[#allocation8 + $0x98] sm:$0xff]
    %v832 = vld [vmem:[#allocation8 + $0xa0] sm:$0xff]
    %v833 = vld [vmem:[#allocation8 + $0xa8] sm:$0xff]
    %v834 = vld [vmem:[#allocation8 + $0xb0] sm:$0xff]
    %v835 = vld [vmem:[#allocation8 + $0xb8] sm:$0xff]
    %v836 = vld [vmem:[#allocation8 + $0xc0] sm:$0xff]
    %v837 = vld [vmem:[#allocation8 + $0xc8] sm:$0xff]
    %v838 = vld [vmem:[#allocation8 + $0xd0] sm:$0xff]
    %v839 = vld [vmem:[#allocation8 + $0xd8] sm:$0xff]
    %v840 = vld [vmem:[#allocation8 + $0xe0] sm:$0xff]
    %v841 = vld [vmem:[#allocation8 + $0xe8] sm:$0xff]
    %v842 = vld [vmem:[#allocation8 + $0xf0] sm:$0xff]
    %v843 = vld [vmem:[#allocation8 + $0xf8] sm:$0xff]
    %v844 = vld [vmem:[#allocation8 + $0x100] sm:$0xff]
    %v845 = vld [vmem:[#allocation8 + $0x108] sm:$0xff]
    %v846 = vld [vmem:[#allocation8 + $0x110] sm:$0xff]
    %v847 = vld [vmem:[#allocation8 + $0x118] sm:$0xff]
    %v848 = vld [vmem:[#allocation8 + $0x120] sm:$0xff]
    %v849 = vld [vmem:[#allocation8 + $0x128] sm:$0xff]
    %v850 = vld [vmem:[#allocation8 + $0x130] sm:$0xff]
    %v851 = vld [vmem:[#allocation8 + $0x138] sm:$0xff]
    %v852 = vld [vmem:[#allocation8 + $0x140] sm:$0xff]
    %v853 = vld [vmem:[#allocation8 + $0x148] sm:$0xff]
    %v854 = vld [vmem:[#allocation8 + $0x150] sm:$0xff]
    %v855 = vld [vmem:[#allocation8 + $0x158] sm:$0xff]
    %v856 = vld [vmem:[#allocation8 + $0x160] sm:$0xff]
    %v857 = vld [vmem:[#allocation8 + $0x168] sm:$0xff]
    %v858 = vld [vmem:[#allocation8 + $0x170] sm:$0xff]
    %v859 = vld [vmem:[#allocation8 + $0x178] sm:$0xff]
    %v860 = vld [vmem:[#allocation8 + $0x180] sm:$0xff]
    %v861 = vld [vmem:[#allocation8 + $0x188] sm:$0xff]
    %v862 = vld [vmem:[#allocation8 + $0x190] sm:$0xff]
    %v863 = vld [vmem:[#allocation8 + $0x198] sm:$0xff]
    %v864 = vld [vmem:[#allocation8 + $0x1a0] sm:$0xff]
    %v865 = vld [vmem:[#allocation8 + $0x1a8] sm:$0xff]
    %v866 = vld [vmem:[#allocation8 + $0x1b0] sm:$0xff]
    %v867 = vld [vmem:[#allocation8 + $0x1b8] sm:$0xff]
    %v868 = vld [vmem:[#allocation8 + $0x1c0] sm:$0xff]
    %v869 = vld [vmem:[#allocation8 + $0x1c8] sm:$0xff]
    %v870 = vld [vmem:[#allocation8 + $0x1d0] sm:$0xff]
    %v871 = vld [vmem:[#allocation8 + $0x1d8] sm:$0xff]
    %v872 = vld [vmem:[#allocation8 + $0x1e0] sm:$0xff]
    %v873 = vld [vmem:[#allocation8 + $0x1e8] sm:$0xff]
    %v874 = vld [vmem:[#allocation8 + $0x1f0] sm:$0xff]
    %v875 = vld [vmem:[#allocation8 + $0x1f8] sm:$0xff]
    %v876 = vld [vmem:[%s7] sm:$0x3]
    %v878 = vlaneseq
    %v879 = vshrl.u32 %v878, 7
    %v880 = vsub.s32 0, %v879
    %v881 = vrot.slane %v876, %v880
    %v882 = vlaneseq
    %v883 = vshrl.u32 %v882, 7
    %v884 = vsub.s32 1, %v883
    %v885 = vrot.slane %v876, %v884
    %v952 = vunpack.c.l.b16 %v812
    %v953 = vunpack.c.h.b16 %v812
    %v954 = vunpack.c.l.b16 %v813
    %v955 = vunpack.c.h.b16 %v813
    %v956 = vunpack.c.l.b16 %v814
    %v957 = vunpack.c.h.b16 %v814
    %v958 = vunpack.c.l.b16 %v815
    %v959 = vunpack.c.h.b16 %v815
    %v960 = vunpack.c.l.b16 %v816
    %v961 = vunpack.c.h.b16 %v816
    %v962 = vunpack.c.l.b16 %v817
    %v963 = vunpack.c.h.b16 %v817
    %v964 = vunpack.c.l.b16 %v818
    %v965 = vunpack.c.h.b16 %v818
    %v966 = vunpack.c.l.b16 %v819
    %v967 = vunpack.c.h.b16 %v819
    %v968 = vunpack.c.l.b16 %v820
    %v969 = vunpack.c.h.b16 %v820
    %v970 = vunpack.c.l.b16 %v821
    %v971 = vunpack.c.h.b16 %v821
    %v972 = vunpack.c.l.b16 %v822
    %v973 = vunpack.c.h.b16 %v822
    %v974 = vunpack.c.l.b16 %v823
    %v975 = vunpack.c.h.b16 %v823
    %v976 = vunpack.c.l.b16 %v824
    %v977 = vunpack.c.h.b16 %v824
    %v978 = vunpack.c.l.b16 %v825
    %v979 = vunpack.c.h.b16 %v825
    %v980 = vunpack.c.l.b16 %v826
    %v981 = vunpack.c.h.b16 %v826
    %v982 = vunpack.c.l.b16 %v827
    %v983 = vunpack.c.h.b16 %v827
    %v984 = vunpack.c.l.b16 %v828
    %v985 = vunpack.c.h.b16 %v828
    %v986 = vunpack.c.l.b16 %v829
    %v987 = vunpack.c.h.b16 %v829
    %v988 = vunpack.c.l.b16 %v830
    %v989 = vunpack.c.h.b16 %v830
    %v990 = vunpack.c.l.b16 %v831
    %v991 = vunpack.c.h.b16 %v831
    %v992 = vunpack.c.l.b16 %v832
    %v993 = vunpack.c.h.b16 %v832
    %v994 = vunpack.c.l.b16 %v833
    %v995 = vunpack.c.h.b16 %v833
    %v996 = vunpack.c.l.b16 %v834
    %v997 = vunpack.c.h.b16 %v834
    %v998 = vunpack.c.l.b16 %v835
    %v999 = vunpack.c.h.b16 %v835
    %v1000 = vunpack.c.l.b16 %v836
    %v1001 = vunpack.c.h.b16 %v836
    %v1002 = vunpack.c.l.b16 %v837
    %v1003 = vunpack.c.h.b16 %v837
    %v1004 = vunpack.c.l.b16 %v838
    %v1005 = vunpack.c.h.b16 %v838
    %v1006 = vunpack.c.l.b16 %v839
    %v1007 = vunpack.c.h.b16 %v839
    %v1008 = vunpack.c.l.b16 %v840
    %v1009 = vunpack.c.h.b16 %v840
    %v1010 = vunpack.c.l.b16 %v841
    %v1011 = vunpack.c.h.b16 %v841
    %v1012 = vunpack.c.l.b16 %v842
    %v1013 = vunpack.c.h.b16 %v842
    %v1014 = vunpack.c.l.b16 %v843
    %v1015 = vunpack.c.h.b16 %v843
    %v1016 = vunpack.c.l.b16 %v844
    %v1017 = vunpack.c.h.b16 %v844
    %v1018 = vunpack.c.l.b16 %v845
    %v1019 = vunpack.c.h.b16 %v845
    %v1020 = vunpack.c.l.b16 %v846
    %v1021 = vunpack.c.h.b16 %v846
    %v1022 = vunpack.c.l.b16 %v847
    %v1023 = vunpack.c.h.b16 %v847
    %v1024 = vunpack.c.l.b16 %v848
    %v1025 = vunpack.c.h.b16 %v848
    %v1026 = vunpack.c.l.b16 %v849
    %v1027 = vunpack.c.h.b16 %v849
    %v1028 = vunpack.c.l.b16 %v850
    %v1029 = vunpack.c.h.b16 %v850
    %v1030 = vunpack.c.l.b16 %v851
    %v1031 = vunpack.c.h.b16 %v851
    %v1032 = vunpack.c.l.b16 %v852
    %v1033 = vunpack.c.h.b16 %v852
    %v1034 = vunpack.c.l.b16 %v853
    %v1035 = vunpack.c.h.b16 %v853
    %v1036 = vunpack.c.l.b16 %v854
    %v1037 = vunpack.c.h.b16 %v854
    %v1038 = vunpack.c.l.b16 %v855
    %v1039 = vunpack.c.h.b16 %v855
    %v1040 = vunpack.c.l.b16 %v856
    %v1041 = vunpack.c.h.b16 %v856
    %v1042 = vunpack.c.l.b16 %v857
    %v1043 = vunpack.c.h.b16 %v857
    %v1044 = vunpack.c.l.b16 %v858
    %v1045 = vunpack.c.h.b16 %v858
    %v1046 = vunpack.c.l.b16 %v859
    %v1047 = vunpack.c.h.b16 %v859
    %v1048 = vunpack.c.l.b16 %v860
    %v1049 = vunpack.c.h.b16 %v860
    %v1050 = vunpack.c.l.b16 %v861
    %v1051 = vunpack.c.h.b16 %v861
    %v1052 = vunpack.c.l.b16 %v862
    %v1053 = vunpack.c.h.b16 %v862
    %v1054 = vunpack.c.l.b16 %v863
    %v1055 = vunpack.c.h.b16 %v863
    %v1056 = vunpack.c.l.b16 %v864
    %v1057 = vunpack.c.h.b16 %v864
    %v1058 = vunpack.c.l.b16 %v865
    %v1059 = vunpack.c.h.b16 %v865
    %v1060 = vunpack.c.l.b16 %v866
    %v1061 = vunpack.c.h.b16 %v866
    %v1062 = vunpack.c.l.b16 %v867
    %v1063 = vunpack.c.h.b16 %v867
    %v1064 = vunpack.c.l.b16 %v868
    %v1065 = vunpack.c.h.b16 %v868
    %v1066 = vunpack.c.l.b16 %v869
    %v1067 = vunpack.c.h.b16 %v869
    %v1068 = vunpack.c.l.b16 %v870
    %v1069 = vunpack.c.h.b16 %v870
    %v1070 = vunpack.c.l.b16 %v871
    %v1071 = vunpack.c.h.b16 %v871
    %v1072 = vunpack.c.l.b16 %v872
    %v1073 = vunpack.c.h.b16 %v872
    %v1074 = vunpack.c.l.b16 %v873
    %v1075 = vunpack.c.h.b16 %v873
    %v1076 = vunpack.c.l.b16 %v874
    %v1077 = vunpack.c.h.b16 %v874
    %v1078 = vunpack.c.l.b16 %v875
    %v1079 = vunpack.c.h.b16 %v875
    %v1080 = vpack.c.b16 %v954, %v952
    %v1081 = vpack.c.b16 %v955, %v953
    %v1082 = vpack.c.b16 %v958, %v956
    %v1083 = vpack.c.b16 %v959, %v957
    %v1084 = vpack.c.b16 %v962, %v960
    %v1085 = vpack.c.b16 %v963, %v961
    %v1086 = vpack.c.b16 %v966, %v964
    %v1087 = vpack.c.b16 %v967, %v965
    %v1088 = vpack.c.b16 %v970, %v968
    %v1089 = vpack.c.b16 %v971, %v969
    %v1090 = vpack.c.b16 %v974, %v972
    %v1091 = vpack.c.b16 %v975, %v973
    %v1092 = vpack.c.b16 %v978, %v976
    %v1093 = vpack.c.b16 %v979, %v977
    %v1094 = vpack.c.b16 %v982, %v980
    %v1095 = vpack.c.b16 %v983, %v981
    %v1096 = vpack.c.b16 %v986, %v984
    %v1097 = vpack.c.b16 %v987, %v985
    %v1098 = vpack.c.b16 %v990, %v988
    %v1099 = vpack.c.b16 %v991, %v989
    %v1100 = vpack.c.b16 %v994, %v992
    %v1101 = vpack.c.b16 %v995, %v993
    %v1102 = vpack.c.b16 %v998, %v996
    %v1103 = vpack.c.b16 %v999, %v997
    %v1104 = vpack.c.b16 %v1002, %v1000
    %v1105 = vpack.c.b16 %v1003, %v1001
    %v1106 = vpack.c.b16 %v1006, %v1004
    %v1107 = vpack.c.b16 %v1007, %v1005
    %v1108 = vpack.c.b16 %v1010, %v1008
    %v1109 = vpack.c.b16 %v1011, %v1009
    %v1110 = vpack.c.b16 %v1014, %v1012
    %v1111 = vpack.c.b16 %v1015, %v1013
    %v1112 = vpack.c.b16 %v1018, %v1016
    %v1113 = vpack.c.b16 %v1019, %v1017
    %v1114 = vpack.c.b16 %v1022, %v1020
    %v1115 = vpack.c.b16 %v1023, %v1021
    %v1116 = vpack.c.b16 %v1026, %v1024
    %v1117 = vpack.c.b16 %v1027, %v1025
    %v1118 = vpack.c.b16 %v1030, %v1028
    %v1119 = vpack.c.b16 %v1031, %v1029
    %v1120 = vpack.c.b16 %v1034, %v1032
    %v1121 = vpack.c.b16 %v1035, %v1033
    %v1122 = vpack.c.b16 %v1038, %v1036
    %v1123 = vpack.c.b16 %v1039, %v1037
    %v1124 = vpack.c.b16 %v1042, %v1040
    %v1125 = vpack.c.b16 %v1043, %v1041
    %v1126 = vpack.c.b16 %v1046, %v1044
    %v1127 = vpack.c.b16 %v1047, %v1045
    %v1128 = vpack.c.b16 %v1050, %v1048
    %v1129 = vpack.c.b16 %v1051, %v1049
    %v1130 = vpack.c.b16 %v1054, %v1052
    %v1131 = vpack.c.b16 %v1055, %v1053
    %v1132 = vpack.c.b16 %v1058, %v1056
    %v1133 = vpack.c.b16 %v1059, %v1057
    %v1134 = vpack.c.b16 %v1062, %v1060
    %v1135 = vpack.c.b16 %v1063, %v1061
    %v1136 = vpack.c.b16 %v1066, %v1064
    %v1137 = vpack.c.b16 %v1067, %v1065
    %v1138 = vpack.c.b16 %v1070, %v1068
    %v1139 = vpack.c.b16 %v1071, %v1069
    %v1140 = vpack.c.b16 %v1074, %v1072
    %v1141 = vpack.c.b16 %v1075, %v1073
    %v1142 = vpack.c.b16 %v1078, %v1076
    %v1143 = vpack.c.b16 %v1079, %v1077
    %1208 = vmatprep.subr.bf16.mxu0 %v1095
    %1209 = vmatpush1.bf16.msra.mxu0 %v1094
    %1210 = vmatprep.subr.bf16.mxu0 %v1093
    %1211 = vmatpush1.bf16.msra.mxu0 %v1092
    %1212 = vmatprep.subr.bf16.mxu0 %v1091
    %1213 = vmatpush1.bf16.msra.mxu0 %v1090
    %1214 = vmatprep.subr.bf16.mxu0 %v1089
    %1215 = vmatpush1.bf16.msra.mxu0 %v1088
    %1216 = vmatprep.subr.bf16.mxu0 %v1087
    %1217 = vmatpush1.bf16.msra.mxu0 %v1086
    %1218 = vmatprep.subr.bf16.mxu0 %v1085
    %1219 = vmatpush1.bf16.msra.mxu0 %v1084
    %1220 = vmatprep.subr.bf16.mxu0 %v1083
    %1221 = vmatpush1.bf16.msra.mxu0 %v1082
    %1222 = vmatprep.subr.bf16.mxu0 %v1081
    %1223 = vmatpush1.bf16.msra.mxu0 %v1080
    %1224 = vmatprep.subr.bf16.mxu0 %v1111
    %1225 = vmatpush2.bf16.msra.mxu0 %v1110
    %1226 = vmatprep.subr.bf16.mxu0 %v1109
    %1227 = vmatpush2.bf16.msra.mxu0 %v1108
    %1228 = vmatprep.subr.bf16.mxu0 %v1107
    %1229 = vmatpush2.bf16.msra.mxu0 %v1106
    %1230 = vmatprep.subr.bf16.mxu0 %v1105
    %1231 = vmatpush2.bf16.msra.mxu0 %v1104
    %1232 = vmatprep.subr.bf16.mxu0 %v1103
    %1233 = vmatpush2.bf16.msra.mxu0 %v1102
    %1234 = vmatprep.subr.bf16.mxu0 %v1101
    %1235 = vmatpush2.bf16.msra.mxu0 %v1100
    %1236 = vmatprep.subr.bf16.mxu0 %v1099
    %1237 = vmatpush2.bf16.msra.mxu0 %v1098
    %1238 = vmatprep.subr.bf16.mxu0 %v1097
    %1239 = vmatpush2.bf16.msra.mxu0 %v1096
    %1240 = vmatprep.mubr.bf16.mxu0 %v809
    %1241 = vmatmul.mubr.bf16.gmra.mxu0 %v808
    %v1242 = vpop.f32.mrf.mxu0
    %v1243 = vadd.f32 %v881, %v1242
    %v1244 = vpop.f32.mrf.mxu0
    %v1245 = vadd.f32 %v885, %v1244
    %v1246 = vpop.f32.mrf.mxu0
    %v1247 = vpop.f32.mrf.mxu0
    %1248 = vdwg.mxu0
    %1249 = vmatprep.subr.bf16.mxu0 %v1127
    %1250 = vmatpush1.bf16.msra.mxu0 %v1126
    %1251 = vmatprep.subr.bf16.mxu0 %v1125
    %1252 = vmatpush1.bf16.msra.mxu0 %v1124
    %1253 = vmatprep.subr.bf16.mxu0 %v1123
    %1254 = vmatpush1.bf16.msra.mxu0 %v1122
    %1255 = vmatprep.subr.bf16.mxu0 %v1121
    %1256 = vmatpush1.bf16.msra.mxu0 %v1120
    %1257 = vmatprep.subr.bf16.mxu0 %v1119
    %1258 = vmatpush1.bf16.msra.mxu0 %v1118
    %1259 = vmatprep.subr.bf16.mxu0 %v1117
    %1260 = vmatpush1.bf16.msra.mxu0 %v1116
    %1261 = vmatprep.subr.bf16.mxu0 %v1115
    %1262 = vmatpush1.bf16.msra.mxu0 %v1114
    %1263 = vmatprep.subr.bf16.mxu0 %v1113
    %1264 = vmatpush1.bf16.msra.mxu0 %v1112
    %1265 = vmatprep.subr.bf16.mxu0 %v1143
    %1266 = vmatpush2.bf16.msra.mxu0 %v1142
    %1267 = vmatprep.subr.bf16.mxu0 %v1141
    %1268 = vmatpush2.bf16.msra.mxu0 %v1140
    %1269 = vmatprep.subr.bf16.mxu0 %v1139
    %1270 = vmatpush2.bf16.msra.mxu0 %v1138
    %1271 = vmatprep.subr.bf16.mxu0 %v1137
    %1272 = vmatpush2.bf16.msra.mxu0 %v1136
    %1273 = vmatprep.subr.bf16.mxu0 %v1135
    %1274 = vmatpush2.bf16.msra.mxu0 %v1134
    %1275 = vmatprep.subr.bf16.mxu0 %v1133
    %1276 = vmatpush2.bf16.msra.mxu0 %v1132
    %1277 = vmatprep.subr.bf16.mxu0 %v1131
    %1278 = vmatpush2.bf16.msra.mxu0 %v1130
    %1279 = vmatprep.subr.bf16.mxu0 %v1129
    %1280 = vmatpush2.bf16.msra.mxu0 %v1128
    %1281 = vmatprep.mubr.bf16.mxu0 %v811
    %1282 = vmatmul.mubr.bf16.gmra.mxu0 %v810
    %v1283 = vpop.f32.mrf.mxu0
    %v1284 = vadd.f32 %v1243, %v1283
    %v1285 = vpop.f32.mrf.mxu0
    %v1286 = vadd.f32 %v1245, %v1285
    %v1287 = vpop.f32.mrf.mxu0
    %v1288 = vpop.f32.mrf.mxu0
    %1289 = vdwg.mxu0
    %vm1290 = vcmp.ge.f32.partialorder %v1284, 0.0
    %vm1291 = vcmp.ge.f32.partialorder %v1286, 0.0
    %v1292 = vmul.f32 %v1284, 0.01
    %v1293 = vmul.f32 %v1286, 0.01
    %v1294 = vsel %vm1290, %v1284, %v1292
    %v1295 = vsel %vm1291, %v1286, %v1293
    %v1296 = vpack.c.bf16 %v1294, %v1294
    %v1297 = vpack.c.bf16 %v1295, %v1295
    %v1298 = vld [vmem:[%s8] sm:$0xf]
    %v1299 = vld [vmem:[%s8 + $0x4] sm:$0xf]
    %v1300 = vld [vmem:[%s8 + $0x8] sm:$0xf]
    %v1301 = vld [vmem:[%s8 + $0xc] sm:$0xf]
    %v1302 = vld [vmem:[%s8 + $0x10] sm:$0xf]
    %v1303 = vld [vmem:[%s8 + $0x14] sm:$0xf]
    %v1304 = vld [vmem:[%s8 + $0x18] sm:$0xf]
    %v1305 = vld [vmem:[%s8 + $0x1c] sm:$0xf]
    %v1306 = vld [vmem:[%s8 + $0x20] sm:$0xf]
    %v1307 = vld [vmem:[%s8 + $0x24] sm:$0xf]
    %v1308 = vld [vmem:[%s8 + $0x28] sm:$0xf]
    %v1309 = vld [vmem:[%s8 + $0x2c] sm:$0xf]
    %v1310 = vld [vmem:[%s8 + $0x30] sm:$0xf]
    %v1311 = vld [vmem:[%s8 + $0x34] sm:$0xf]
    %v1312 = vld [vmem:[%s8 + $0x38] sm:$0xf]
    %v1313 = vld [vmem:[%s8 + $0x3c] sm:$0xf]
    %v1314 = vld [vmem:[%s8 + $0x40] sm:$0xf]
    %v1315 = vld [vmem:[%s8 + $0x44] sm:$0xf]
    %v1316 = vld [vmem:[%s8 + $0x48] sm:$0xf]
    %v1317 = vld [vmem:[%s8 + $0x4c] sm:$0xf]
    %v1318 = vld [vmem:[%s8 + $0x50] sm:$0xf]
    %v1319 = vld [vmem:[%s8 + $0x54] sm:$0xf]
    %v1320 = vld [vmem:[%s8 + $0x58] sm:$0xf]
    %v1321 = vld [vmem:[%s8 + $0x5c] sm:$0xf]
    %v1322 = vld [vmem:[%s8 + $0x60] sm:$0xf]
    %v1323 = vld [vmem:[%s8 + $0x64] sm:$0xf]
    %v1324 = vld [vmem:[%s8 + $0x68] sm:$0xf]
    %v1325 = vld [vmem:[%s8 + $0x6c] sm:$0xf]
    %v1326 = vld [vmem:[%s8 + $0x70] sm:$0xf]
    %v1327 = vld [vmem:[%s8 + $0x74] sm:$0xf]
    %v1328 = vld [vmem:[%s8 + $0x78] sm:$0xf]
    %v1329 = vld [vmem:[%s8 + $0x7c] sm:$0xf]
    %v1330 = vld [vmem:[%s9] sm:$0x1]
    %v1332 = vlaneseq
    %v1333 = vshrl.u32 %v1332, 7
    %v1334 = vsub.s32 0, %v1333
    %v1335 = vrot.slane %v1330, %v1334
    %v1369 = vunpack.c.l.b16 %v1298
    %v1370 = vunpack.c.l.b16 %v1299
    %v1371 = vunpack.c.l.b16 %v1300
    %v1372 = vunpack.c.l.b16 %v1301
    %v1373 = vunpack.c.l.b16 %v1302
    %v1374 = vunpack.c.l.b16 %v1303
    %v1375 = vunpack.c.l.b16 %v1304
    %v1376 = vunpack.c.l.b16 %v1305
    %v1377 = vunpack.c.l.b16 %v1306
    %v1378 = vunpack.c.l.b16 %v1307
    %v1379 = vunpack.c.l.b16 %v1308
    %v1380 = vunpack.c.l.b16 %v1309
    %v1381 = vunpack.c.l.b16 %v1310
    %v1382 = vunpack.c.l.b16 %v1311
    %v1383 = vunpack.c.l.b16 %v1312
    %v1384 = vunpack.c.l.b16 %v1313
    %v1385 = vunpack.c.l.b16 %v1314
    %v1386 = vunpack.c.l.b16 %v1315
    %v1387 = vunpack.c.l.b16 %v1316
    %v1388 = vunpack.c.l.b16 %v1317
    %v1389 = vunpack.c.l.b16 %v1318
    %v1390 = vunpack.c.l.b16 %v1319
    %v1391 = vunpack.c.l.b16 %v1320
    %v1392 = vunpack.c.l.b16 %v1321
    %v1393 = vunpack.c.l.b16 %v1322
    %v1394 = vunpack.c.l.b16 %v1323
    %v1395 = vunpack.c.l.b16 %v1324
    %v1396 = vunpack.c.l.b16 %v1325
    %v1397 = vunpack.c.l.b16 %v1326
    %v1398 = vunpack.c.l.b16 %v1327
    %v1399 = vunpack.c.l.b16 %v1328
    %v1400 = vunpack.c.l.b16 %v1329
    %v1401 = vpack.c.b16 %v1370, %v1369
    %v1402 = vpack.c.b16 %v1372, %v1371
    %v1403 = vpack.c.b16 %v1374, %v1373
    %v1404 = vpack.c.b16 %v1376, %v1375
    %v1405 = vpack.c.b16 %v1378, %v1377
    %v1406 = vpack.c.b16 %v1380, %v1379
    %v1407 = vpack.c.b16 %v1382, %v1381
    %v1408 = vpack.c.b16 %v1384, %v1383
    %v1409 = vpack.c.b16 %v1386, %v1385
    %v1410 = vpack.c.b16 %v1388, %v1387
    %v1411 = vpack.c.b16 %v1390, %v1389
    %v1412 = vpack.c.b16 %v1392, %v1391
    %v1413 = vpack.c.b16 %v1394, %v1393
    %v1414 = vpack.c.b16 %v1396, %v1395
    %v1415 = vpack.c.b16 %v1398, %v1397
    %v1416 = vpack.c.b16 %v1400, %v1399
    %1433 = vmatprep.subr.bf16.mxu0 0
    %1434 = vmatpush1.bf16.msra.mxu0 %v1408
    %1435 = vmatprep.subr.bf16.mxu0 0
    %1436 = vmatpush1.bf16.msra.mxu0 %v1407
    %1437 = vmatprep.subr.bf16.mxu0 0
    %1438 = vmatpush1.bf16.msra.mxu0 %v1406
    %1439 = vmatprep.subr.bf16.mxu0 0
    %1440 = vmatpush1.bf16.msra.mxu0 %v1405
    %1441 = vmatprep.subr.bf16.mxu0 0
    %1442 = vmatpush1.bf16.msra.mxu0 %v1404
    %1443 = vmatprep.subr.bf16.mxu0 0
    %1444 = vmatpush1.bf16.msra.mxu0 %v1403
    %1445 = vmatprep.subr.bf16.mxu0 0
    %1446 = vmatpush1.bf16.msra.mxu0 %v1402
    %1447 = vmatprep.subr.bf16.mxu0 0
    %1448 = vmatpush1.bf16.msra.mxu0 %v1401
    %1449 = vmatprep.subr.bf16.mxu0 0
    %1450 = vmatpush2.bf16.msra.mxu0 %v1416
    %1451 = vmatprep.subr.bf16.mxu0 0
    %1452 = vmatpush2.bf16.msra.mxu0 %v1415
    %1453 = vmatprep.subr.bf16.mxu0 0
    %1454 = vmatpush2.bf16.msra.mxu0 %v1414
    %1455 = vmatprep.subr.bf16.mxu0 0
    %1456 = vmatpush2.bf16.msra.mxu0 %v1413
    %1457 = vmatprep.subr.bf16.mxu0 0
    %1458 = vmatpush2.bf16.msra.mxu0 %v1412
    %1459 = vmatprep.subr.bf16.mxu0 0
    %1460 = vmatpush2.bf16.msra.mxu0 %v1411
    %1461 = vmatprep.subr.bf16.mxu0 0
    %1462 = vmatpush2.bf16.msra.mxu0 %v1410
    %1463 = vmatprep.subr.bf16.mxu0 0
    %1464 = vmatpush2.bf16.msra.mxu0 %v1409
    %1465 = vmatprep.mubr.bf16.mxu0 %v1297
    %1466 = vmatmul.mubr.bf16.gmra.mxu0 %v1296
    %v1467 = vpop.f32.mrf.mxu0
    %v1468 = vadd.f32 %v1335, %v1467
    %v1469 = vpop.f32.mrf.mxu0
    %v1470 = vpop.f32.mrf.mxu0
    %v1471 = vpop.f32.mrf.mxu0
    %1472 = vdwg.mxu0
    %vm1473 = vcmask 9216
    %1474 = vst.msk [vmem:[#allocation10] sm:$0x3] %vm1473, %v1468
    // Predicated region
    $region58: #{tpu_custom_call.1} parent=1 // pred_check
      _
    $region59: #{tpu_custom_call.1} parent=1 // pred_check_branch
      %1476 = sbr.rel (0) target = $region61
    $region60: #{tpu_custom_call.1} parent=1 // pred_region
      %s1478 = ssub.s32 32, 32
      %1479 = vsyncadd [#allocation4], %s1478
      %s1481 = sshll.u32 [#allocation10], 4
      %s1482 = int_to_ptr.vmem [resolvable:$true] %s1481
      %1484 = dma.vmem_to_hbm [thread:$0]  %s1482, 32, %s10, [#allocation4]
    $region61: #{tpu_custom_call.1} parent=1 // pred_fallthru
      _
    // Predicated region
    $region62: #{tpu_custom_call.1} parent=1 // pred_check
      _
    $region63: #{tpu_custom_call.1} parent=1 // pred_check_branch
      %1486 = sbr.rel (0) target = $region65
    $region64: #{tpu_custom_call.1} parent=1 // pred_region
      %1487 = dma.done [#allocation4], 32
    $region65: #{tpu_custom_call.1} parent=1 // pred_fallthru
      _
    %1488 = vsyncpa [#allocation3], 1
    %1489 = vsyncpa [#allocation6], 1
    %1490 = vsyncpa [#allocation9], 1
    %1491 = vsyncpa [#allocation4], 1

</llo_original>
